<compile_context>
chip_gen: v6e
topology: v6e:2x2x1
jax: 0.10.0
libtpu: 0.0.40
codegen_flags: <defaults>
</compile_context>

<pallas_src>
import functools

import jax
import jax.numpy as jnp
from jax.experimental import pallas as pl
from jax.experimental.pallas import tpu as pltpu


def _round_up(x, m):
    return (x + m - 1) // m * m


# ------------------------------ Pallas kernel --------------------------------

def _fused_double_conv_kernel(xp_ref, w1_ref, w2_ref, b2_ref, o_ref, a1b_ref,
                              *, Wc, o2_len, band_off):
    """One image: conv3x3(3->64)+ReLU -> conv3x3(64->64)+ReLU, all in VMEM.

    xp_ref  : (a1_len, 32)    tap-packed layer-1 input slab (27 taps + bias
                              indicator channel, padded to 32), exact zeros
                              outside the true image pixels
    w1_ref  : (32, C1)        packed layer-1 weights (row 27 = bias)
    w2_ref  : (3, C2, 3*C1)   layer-2 weights banded along kw, indexed by kh
    b2_ref  : (C2, 1)
    o_ref   : (C2, o2_len)    channels-major, lane-dense output slab
    a1b_ref : (a1b_len, 3*C1) VMEM scratch: kw-banded layer-1 activation
    """
    c1 = w1_ref.shape[1]
    a1b_len = a1b_ref.shape[0]

    # ---- layer 1: single packed matmul (K = 9*3 + 1 -> 32) + ReLU -----------
    # Bias is the indicator channel, so padding-ring rows come out exactly 0.
    a1 = jnp.maximum(
        jnp.dot(xp_ref[...], w1_ref[...], preferred_element_type=jnp.float32),
        0.0)                                             # (a1_len, C1)

    # ---- band the activation: a1b[q, kw*C1:(kw+1)*C1] = a1[q + band_off+kw-1]
    for kw in range(3):
        s = band_off + kw - 1
        a1b_ref[:, kw * c1:(kw + 1) * c1] = a1[s:s + a1b_len, :]

    # ---- layer 2: three K=192 dot_generals, channels-major accumulation -----
    acc = None
    for kh in range(3):
        x = a1b_ref[pl.ds(Wc * kh, o2_len), :]           # (o2_len, 3*C1), 8-aligned rows
        d = jax.lax.dot_general(
            w2_ref[kh], x,
            dimension_numbers=(((1,), (1,)), ((), ())),  # (C2,3C1) x (M,3C1)^T
            preferred_element_type=jnp.float32)          # (C2, o2_len)
        acc = d if acc is None else acc + d
    o_ref[...] = jnp.maximum(acc + b2_ref[...], 0.0).astype(o_ref.dtype)


# ------------------------------ forward wrapper -------------------------------

def conv_init3_forward(x_nchw, params):
    w1, b1 = params["w1"], params["b1"]        # (C1, 3, 3, 3), (C1,)
    w2, b2 = params["w2"], params["b2"]        # (C2, C1, 3, 3), (C2,)
    N, Cin, H, W = x_nchw.shape
    C1, C2 = w1.shape[0], w2.shape[0]
    cin_p = 32                                  # 9*Cin + 1 bias channel -> 32

    # Canvas geometry: image placed at (P, P) on a Wc-wide canvas; the whole
    # canvas is row-flattened so every 3x3 tap is a fixed row offset.
    P = 3
    Wc = _round_up(W + 2 * P, 8)                # 8-aligned canvas width
    o2_start = P * Wc                           # first output canvas row
    o2_len = _round_up(H * Wc, 128)             # lane-dense output slab width
    a1b_start = o2_start - Wc                   # banded-activation slab origin
    band_off = 8
    a1_start = a1b_start - band_off             # 8-aligned layer-1 slab origin
    a1b_len = o2_len + 2 * Wc
    a1_len = _round_up(a1b_len + band_off + 1, 8)
    a1_end = a1_start + a1_len

    # --- tap packing (tiny XLA ops; zeros everywhere outside the image) ------
    x_nhwc = jnp.transpose(x_nchw, (0, 2, 3, 1)).astype(jnp.float32)
    x1 = jnp.pad(x_nhwc, ((0, 0), (1, 1), (1, 1), (0, 0)))          # conv pad 1
    taps = [x1[:, kh:kh + H, kw:kw + W, :] for kh in range(3) for kw in range(3)]
    taps.append(jnp.ones((N, H, W, 1), jnp.float32))                # bias channel
    packed = jnp.concatenate(taps, axis=-1)                         # (N,H,W,28)
    packed = jnp.pad(packed, ((0, 0), (0, 0), (0, 0), (0, cin_p - packed.shape[-1])))
    canvas = jnp.pad(packed, ((0, 0), (P, P), (P, Wc - P - W), (0, 0)))
    flat = canvas.reshape(N, (H + 2 * P) * Wc, cin_p)
    if flat.shape[1] < a1_end:                  # cover over-computed rows
        flat = jnp.pad(flat, ((0, 0), (0, a1_end - flat.shape[1]), (0, 0)))
    xp_slab = flat[:, a1_start:a1_end, :]                           # (N, a1_len, 32)

    # --- weight packing -------------------------------------------------------
    w1p = jnp.transpose(w1, (2, 3, 1, 0)).reshape(9 * Cin, C1)      # (27, C1)
    w1p = jnp.concatenate(
        [w1p, b1.reshape(1, C1),
         jnp.zeros((cin_p - 9 * Cin - 1, C1), jnp.float32)], axis=0)  # (32, C1)
    w2band = jnp.transpose(w2, (2, 0, 3, 1)).reshape(3, C2, 3 * C1)   # [kh,c2,kw*C1+c1]
    b2r = b2.reshape(C2, 1)

    kernel = functools.partial(_fused_double_conv_kernel,
                               Wc=Wc, o2_len=o2_len, band_off=band_off)

    out_slab = pl.pallas_call(
        kernel,
        out_shape=jax.ShapeDtypeStruct((N, C2, o2_len), jnp.float32),
        grid=(N,),
        in_specs=[
            pl.BlockSpec((None, a1_len, cin_p), lambda n: (n, 0, 0)),
            pl.BlockSpec((cin_p, C1), lambda n: (0, 0)),
            pl.BlockSpec((3, C2, 3 * C1), lambda n: (0, 0, 0)),
            pl.BlockSpec((C2, 1), lambda n: (0, 0)),
        ],
        out_specs=pl.BlockSpec((None, C2, o2_len), lambda n: (n, 0, 0)),
        scratch_shapes=[pltpu.VMEM((a1b_len, 3 * C1), jnp.float32)],
        compiler_params=pltpu.CompilerParams(
            dimension_semantics=("parallel",)),   # v7x: 2 TCs split the batch
    )(xp_slab, w1p, w2band, b2r)

    # un-canvas: slice the true H*Wc rows, reshape, crop the lateral pad.
    out = out_slab[:, :, :H * Wc].reshape(N, C2, H, Wc)[:, :, :, P:P + W]
    return out


# ------------------------------ params / reference ----------------------------

def init_params(key):
    k = jax.random.split(key, 4)
    return {
        "w1": jax.random.normal(k[0], (64, 3, 3, 3), jnp.float32) * 0.05,
        "b1": jax.random.normal(k[1], (64,), jnp.float32) * 0.05,
        "w2": jax.random.normal(k[2], (64, 64, 3, 3), jnp.float32) * 0.05,
        "b2": jax.random.normal(k[3], (64,), jnp.float32) * 0.05,
    }


def _reference_forward(x, params):
    def conv_relu(x, w, b):
        dn = jax.lax.conv_dimension_numbers(x.shape, w.shape,
                                            ("NCHW", "OIHW", "NCHW"))
        y = jax.lax.conv_general_dilated(
            x, w, window_strides=(1, 1), padding=((1, 1), (1, 1)),
            dimension_numbers=dn, precision=jax.lax.Precision.HIGHEST)
        return jnp.maximum(y + b[None, :, None, None], 0.0)
    y = conv_relu(x, params["w1"], params["b1"])
    return conv_relu(y, params["w2"], params["b2"])


if __name__ == "__main__":
    key = jax.random.PRNGKey(0)
    kx, kp = jax.random.split(key)
    N, C, H, W = 2, 3, 16, 16
    x = jax.random.normal(kx, (N, C, H, W), jnp.float32)
    params = init_params(kp)

    fwd = jax.jit(conv_init3_forward)
    out = jax.block_until_ready(fwd(x, params))

    assert out.shape == (N, 64, H, W), out.shape
    assert bool(jnp.isfinite(out).all())
    ref = _reference_forward(x, params)
    err = float(jnp.max(jnp.abs(out - ref)))
    assert bool(jnp.allclose(out, ref, atol=2e-3, rtol=2e-3)), err
    print("KERNEL_OK")
</pallas_src>

<mosaic_0001>
module attributes {stable_mosaic.version = 11 : i64} {
  func.func @_fused_double_conv_kernel(%arg0: i32, %arg1: memref<1x448x32xf32, #tpu.memory_space<vmem>>, %arg2: memref<32x64xf32, #tpu.memory_space<vmem>>, %arg3: memref<3x64x192xf32, #tpu.memory_space<vmem>>, %arg4: memref<64x1xf32, #tpu.memory_space<vmem>>, %arg5: memref<1x64x384xf32, #tpu.memory_space<vmem>>, %arg6: memref<432x192xf32, #tpu.memory_space<vmem>>) attributes {dimension_semantics = [#tpu.dimension_semantics<parallel>], iteration_bounds = array<i64: 2>, scalar_prefetch = 0 : i64, scratch_operands = 1 : i64, tpu.core_type = #tpu.core_type<tc>, window_params = [{transform_indices = @transform_0, window_bounds = array<i64: 1, 448, 32>}, {pipeline_mode = #tpu.pipeline_mode<synchronous>, transform_indices = @transform_1, window_bounds = array<i64: 32, 64>}, {pipeline_mode = #tpu.pipeline_mode<synchronous>, transform_indices = @transform_2, window_bounds = array<i64: 3, 64, 192>}, {pipeline_mode = #tpu.pipeline_mode<synchronous>, transform_indices = @transform_3, window_bounds = array<i64: 64, 1>}, {transform_indices = @transform_4, window_bounds = array<i64: 1, 64, 384>}]} {
    %c0 = arith.constant 0 : index
    %c0_0 = arith.constant 0 : index
    %c0_1 = arith.constant 0 : index
    %0 = vector.load %arg1[%c0, %c0_0, %c0_1] : memref<1x448x32xf32, #tpu.memory_space<vmem>>, vector<1x448x32xf32>
    %1 = vector.shape_cast %0 : vector<1x448x32xf32> to vector<448x32xf32>
    %c0_2 = arith.constant 0 : index
    %c0_3 = arith.constant 0 : index
    %2 = vector.load %arg2[%c0_2, %c0_3] : memref<32x64xf32, #tpu.memory_space<vmem>>, vector<32x64xf32>
    %cst = arith.constant dense<0.000000e+00> : vector<448x64xf32>
    %3 = tpu.matmul %1, %2, %cst {dimension_numbers = #tpu.dot_dimension_numbers<[1], [0], [0], [1], [0, 0, 1, 1], [], []>} : vector<448x32xf32>, vector<32x64xf32>, vector<448x64xf32> -> vector<448x64xf32>
    %cst_4 = arith.constant 0.000000e+00 : f32
    %4 = vector.broadcast %cst_4 : f32 to vector<448x64xf32>
    %5 = arith.maximumf %3, %4 : vector<448x64xf32>
    %6 = vector.extract_strided_slice %5 {offsets = [7, 0], sizes = [432, 64], strides = [1, 1]} : vector<448x64xf32> to vector<432x64xf32>
    %c0_5 = arith.constant 0 : index
    %c0_6 = arith.constant 0 : index
    %7 = vector.load %arg6[%c0_5, %c0_6] : memref<432x192xf32, #tpu.memory_space<vmem>>, vector<432x64xf32>
    tpu.vector_store %arg6[%c0_5, %c0_6], %6 {strides = array<i32>} : memref<432x192xf32, #tpu.memory_space<vmem>>, vector<432x64xf32>,
    %8 = vector.extract_strided_slice %5 {offsets = [8, 0], sizes = [432, 64], strides = [1, 1]} : vector<448x64xf32> to vector<432x64xf32>
    %c0_7 = arith.constant 0 : index
    %c64 = arith.constant 64 : index
    %9 = vector.load %arg6[%c0_7, %c64] : memref<432x192xf32, #tpu.memory_space<vmem>>, vector<432x64xf32>
    tpu.vector_store %arg6[%c0_7, %c64], %8 {strides = array<i32>} : memref<432x192xf32, #tpu.memory_space<vmem>>, vector<432x64xf32>,
    %10 = vector.extract_strided_slice %5 {offsets = [9, 0], sizes = [432, 64], strides = [1, 1]} : vector<448x64xf32> to vector<432x64xf32>
    %c0_8 = arith.constant 0 : index
    %c128 = arith.constant 128 : index
    %11 = vector.load %arg6[%c0_8, %c128] : memref<432x192xf32, #tpu.memory_space<vmem>>, vector<432x64xf32>
    tpu.vector_store %arg6[%c0_8, %c128], %10 {strides = array<i32>} : memref<432x192xf32, #tpu.memory_space<vmem>>, vector<432x64xf32>,
    %c0_9 = arith.constant 0 : index
    %c0_10 = arith.constant 0 : index
    %12 = vector.load %arg6[%c0_9, %c0_10] : memref<432x192xf32, #tpu.memory_space<vmem>>, vector<384x192xf32>
    %c0_11 = arith.constant 0 : index
    %c0_12 = arith.constant 0 : index
    %c0_13 = arith.constant 0 : index
    %13 = vector.load %arg3[%c0_11, %c0_12, %c0_13] : memref<3x64x192xf32, #tpu.memory_space<vmem>>, vector<1x64x192xf32>
    %14 = vector.shape_cast %13 : vector<1x64x192xf32> to vector<64x192xf32>
    %cst_14 = arith.constant dense<0.000000e+00> : vector<64x384xf32>
    %15 = tpu.matmul %14, %12, %cst_14 {dimension_numbers = #tpu.dot_dimension_numbers<[1], [1], [0], [0], [0, 0, 1, 0], [], []>} : vector<64x192xf32>, vector<384x192xf32>, vector<64x384xf32> -> vector<64x384xf32>
    %c24 = arith.constant 24 : index
    %c0_15 = arith.constant 0 : index
    %16 = vector.load %arg6[%c24, %c0_15] : memref<432x192xf32, #tpu.memory_space<vmem>>, vector<384x192xf32>
    %c1 = arith.constant 1 : index
    %c0_16 = arith.constant 0 : index
    %c0_17 = arith.constant 0 : index
    %17 = vector.load %arg3[%c1, %c0_16, %c0_17] : memref<3x64x192xf32, #tpu.memory_space<vmem>>, vector<1x64x192xf32>
    %18 = vector.shape_cast %17 : vector<1x64x192xf32> to vector<64x192xf32>
    %cst_18 = arith.constant dense<0.000000e+00> : vector<64x384xf32>
    %19 = tpu.matmul %18, %16, %cst_18 {dimension_numbers = #tpu.dot_dimension_numbers<[1], [1], [0], [0], [0, 0, 1, 0], [], []>} : vector<64x192xf32>, vector<384x192xf32>, vector<64x384xf32> -> vector<64x384xf32>
    %20 = arith.addf %15, %19 : vector<64x384xf32>
    %c48 = arith.constant 48 : index
    %c0_19 = arith.constant 0 : index
    %21 = vector.load %arg6[%c48, %c0_19] : memref<432x192xf32, #tpu.memory_space<vmem>>, vector<384x192xf32>
    %c2 = arith.constant 2 : index
    %c0_20 = arith.constant 0 : index
    %c0_21 = arith.constant 0 : index
    %22 = vector.load %arg3[%c2, %c0_20, %c0_21] : memref<3x64x192xf32, #tpu.memory_space<vmem>>, vector<1x64x192xf32>
    %23 = vector.shape_cast %22 : vector<1x64x192xf32> to vector<64x192xf32>
    %cst_22 = arith.constant dense<0.000000e+00> : vector<64x384xf32>
    %24 = tpu.matmul %23, %21, %cst_22 {dimension_numbers = #tpu.dot_dimension_numbers<[1], [1], [0], [0], [0, 0, 1, 0], [], []>} : vector<64x192xf32>, vector<384x192xf32>, vector<64x384xf32> -> vector<64x384xf32>
    %25 = arith.addf %20, %24 : vector<64x384xf32>
    %c0_23 = arith.constant 0 : index
    %c0_24 = arith.constant 0 : index
    %26 = vector.load %arg4[%c0_23, %c0_24] : memref<64x1xf32, #tpu.memory_space<vmem>>, vector<64x1xf32>
    %27 = vector.broadcast %26 : vector<64x1xf32> to vector<64x384xf32>
    %28 = arith.addf %25, %27 : vector<64x384xf32>
    %cst_25 = arith.constant 0.000000e+00 : f32
    %29 = vector.broadcast %cst_25 : f32 to vector<64x384xf32>
    %30 = arith.maximumf %28, %29 : vector<64x384xf32>
    %c0_26 = arith.constant 0 : index
    %c0_27 = arith.constant 0 : index
    %c0_28 = arith.constant 0 : index
    %31 = vector.load %arg5[%c0_26, %c0_27, %c0_28] : memref<1x64x384xf32, #tpu.memory_space<vmem>>, vector<1x64x384xf32>
    %32 = vector.shape_cast %31 : vector<1x64x384xf32> to vector<64x384xf32>
    %33 = vector.shape_cast %30 : vector<64x384xf32> to vector<1x64x384xf32>
    tpu.vector_store %arg5[%c0_26, %c0_27, %c0_28], %33 {strides = array<i32>} : memref<1x64x384xf32, #tpu.memory_space<vmem>>, vector<1x64x384xf32>,
    return
  }
  func.func @transform_0(%arg0: i32) -> (i32, i32, i32) {
    %c0_i32 = arith.constant 0 : i32
    %c0_i32_0 = arith.constant 0 : i32
    %c0_i32_1 = arith.constant 0 : i32
    return %arg0, %c0_i32, %c0_i32_0 : i32, i32, i32
  }
  func.func @transform_1(%arg0: i32) -> (i32, i32) {
    %c0_i32 = arith.constant 0 : i32
    %c0_i32_0 = arith.constant 0 : i32
    %c0_i32_1 = arith.constant 0 : i32
    return %c0_i32, %c0_i32_0 : i32, i32
  }
  func.func @transform_2(%arg0: i32) -> (i32, i32, i32) {
    %c0_i32 = arith.constant 0 : i32
    %c0_i32_0 = arith.constant 0 : i32
    %c0_i32_1 = arith.constant 0 : i32
    %c0_i32_2 = arith.constant 0 : i32
    return %c0_i32, %c0_i32_0, %c0_i32_1 : i32, i32, i32
  }
  func.func @transform_3(%arg0: i32) -> (i32, i32) {
    %c0_i32 = arith.constant 0 : i32
    %c0_i32_0 = arith.constant 0 : i32
    %c0_i32_1 = arith.constant 0 : i32
    return %c0_i32, %c0_i32_0 : i32, i32
  }
  func.func @transform_4(%arg0: i32) -> (i32, i32, i32) {
    %c0_i32 = arith.constant 0 : i32
    %c0_i32_0 = arith.constant 0 : i32
    %c0_i32_1 = arith.constant 0 : i32
    return %arg0, %c0_i32, %c0_i32_0 : i32, i32, i32
  }
}

</mosaic_0001>

<llo_original>
// kernel: conv_init3_forward.1
$region0: #{conv_init3_forward.1}
  #allocation0 [shape = 'u32[]', space=smem, size = 0x4, offset = 0x4, fixed_abs, tag = 'smem constant byte address 0x4 - core index']
  #allocation1 [shape = 'u32[144,128]{1,0:T(1,128)}', space=vmem, size = 0x12000, scoped, tag = 'internal scratch']
  #allocation2 [shape = 'f32[432,192]{1,0:T(8,128)}', space=vmem, size = 0x6c000, scoped, tag = 'scratch operand']
  %s0 = inlined_call_operand.vmem [shape: f32[2,448,32], index: 0, kind: input, shape index: {}]
  %s1 = inlined_call_operand.vmem [shape: f32[32,64], index: 1, kind: input, shape index: {}]
  %s2 = inlined_call_operand.vmem [shape: f32[3,64,192], index: 2, kind: input, shape index: {}]
  %s3 = inlined_call_operand.vmem [shape: f32[64,1], index: 3, kind: input, shape index: {}]
  %s4 = inlined_call_operand.vmem [shape: f32[2,64,384], index: 4, kind: output, shape index: {}]
  %s5 = sld [smem:[#allocation0]]
  $region49: #{conv_init3_forward.1} parent=0
    _
  %s7 = ssub.s32 1, %s5
  %s8 = scalar_select 0, %s7, %s5
  loop: start=0, step=1, limit=4
  $region2: #{conv_init3_forward.1} parent=0 // loop_pre_header
    _
  $region3: #{conv_init3_forward.1} parent=0 // loop_header
    %s10 = sphi 0, %s14
    %p11 = scmp.ge.s32.totalorder %s10, 4
    %s20 = sphi 0, %s22
    %s23 = sphi 0, %s20
    %s24 = sphi 0, %s23
    %s40 = sphi 0, %s24
    %s44 = sphi 0, %s44
    %s46 = sphi 0, %s44
    %s47 = sphi 0, %s46
    %s61 = sphi 0, %s47
    %s65 = sphi 0, %s65
    %s67 = sphi 0, %s65
    %s68 = sphi 0, %s67
    %s82 = sphi 0, %s68
    %s86 = sphi 0, %s86
    %s88 = sphi 0, %s86
    %s89 = sphi 0, %s88
    %s103 = sphi 0, %s89
    %s109 = sphi 0, %s111
    %s112 = sphi 0, %s109
    %s113 = sphi 0, %s112
    %s129 = sphi 0, %s113
  $region4: #{conv_init3_forward.1} parent=0 // loop_header_branch
    %13 = sbr.rel (%p11) target = $region8
  $region5: #{conv_init3_forward.1} parent=0 // loop_body
    %s15 = ssub.s32 %s10, 1
    %s16 = ssub.s32 %s10, 2
    %s17 = sadd.s32 %s10, 1
    %s18 = ssub.s32 %s10, %s17
    %p19 = scmp.eq.s32.totalorder %s18, 0
    %s21 = sadd.s32 %s20, 1
    %s22 = scalar_select %p19, %s20, %s21
    %p25 = pneg %p19
    %p26 = scmp.eq.s32.totalorder %s10, 1
    %p27 = por %p25, %p26
    %p28 = scmp.ne.s32.totalorder %s20, %s23
    %p29 = scmp.eq.s32.totalorder %s10, 0
    %p30 = por %p28, %p29
    %p31 = scmp.ne.s32.totalorder %s20, %s23
    %p32 = scmp.eq.s32.totalorder %s15, 1
    %p33 = por %p31, %p32
    %p34 = scmp.ne.s32.totalorder %s23, %s24
    %p35 = scmp.eq.s32.totalorder %s15, 0
    %p36 = por %p34, %p35
    %p37 = scmp.ne.s32.totalorder %s23, %s24
    %p38 = scmp.eq.s32.totalorder %s16, 1
    %p39 = por %p37, %p38
    %p41 = scmp.ne.s32.totalorder %s24, %s40
    %p42 = scmp.eq.s32.totalorder %s16, 0
    %p43 = por %p41, %p42
    %s45 = sadd.s32 %s44, 1
    %p48 = scmp.eq.s32.totalorder %s10, 1
    %p49 = scmp.ne.s32.totalorder %s44, %s46
    %p50 = scmp.eq.s32.totalorder %s10, 0
    %p51 = por %p49, %p50
    %p52 = scmp.ne.s32.totalorder %s44, %s46
    %p53 = scmp.eq.s32.totalorder %s15, 1
    %p54 = por %p52, %p53
    %p55 = scmp.ne.s32.totalorder %s46, %s47
    %p56 = scmp.eq.s32.totalorder %s15, 0
    %p57 = por %p55, %p56
    %p58 = scmp.ne.s32.totalorder %s46, %s47
    %p59 = scmp.eq.s32.totalorder %s16, 1
    %p60 = por %p58, %p59
    %p62 = scmp.ne.s32.totalorder %s47, %s61
    %p63 = scmp.eq.s32.totalorder %s16, 0
    %p64 = por %p62, %p63
    %s66 = sadd.s32 %s65, 1
    %p69 = scmp.eq.s32.totalorder %s10, 1
    %p70 = scmp.ne.s32.totalorder %s65, %s67
    %p71 = scmp.eq.s32.totalorder %s10, 0
    %p72 = por %p70, %p71
    %p73 = scmp.ne.s32.totalorder %s65, %s67
    %p74 = scmp.eq.s32.totalorder %s15, 1
    %p75 = por %p73, %p74
    %p76 = scmp.ne.s32.totalorder %s67, %s68
    %p77 = scmp.eq.s32.totalorder %s15, 0
    %p78 = por %p76, %p77
    %p79 = scmp.ne.s32.totalorder %s67, %s68
    %p80 = scmp.eq.s32.totalorder %s16, 1
    %p81 = por %p79, %p80
    %p83 = scmp.ne.s32.totalorder %s68, %s82
    %p84 = scmp.eq.s32.totalorder %s16, 0
    %p85 = por %p83, %p84
    %s87 = sadd.s32 %s86, 1
    %p90 = scmp.eq.s32.totalorder %s10, 1
    %p91 = scmp.ne.s32.totalorder %s86, %s88
    %p92 = scmp.eq.s32.totalorder %s10, 0
    %p93 = por %p91, %p92
    %p94 = scmp.ne.s32.totalorder %s86, %s88
    %p95 = scmp.eq.s32.totalorder %s15, 1
    %p96 = por %p94, %p95
    %p97 = scmp.ne.s32.totalorder %s88, %s89
    %p98 = scmp.eq.s32.totalorder %s15, 0
    %p99 = por %p97, %p98
    %p100 = scmp.ne.s32.totalorder %s88, %s89
    %p101 = scmp.eq.s32.totalorder %s16, 1
    %p102 = por %p100, %p101
    %p104 = scmp.ne.s32.totalorder %s89, %s103
    %p105 = scmp.eq.s32.totalorder %s16, 0
    %p106 = por %p104, %p105
    %s107 = ssub.s32 %s10, %s17
    %p108 = scmp.eq.s32.totalorder %s107, 0
    %s110 = sadd.s32 %s109, 1
    %s111 = scalar_select %p108, %s109, %s110
    %p114 = pneg %p108
    %p115 = scmp.eq.s32.totalorder %s10, 1
    %p116 = por %p114, %p115
    %p117 = scmp.ne.s32.totalorder %s109, %s112
    %p118 = scmp.eq.s32.totalorder %s10, 0
    %p119 = por %p117, %p118
    %p120 = scmp.ne.s32.totalorder %s109, %s112
    %p121 = scmp.eq.s32.totalorder %s15, 1
    %p122 = por %p120, %p121
    %p123 = scmp.ne.s32.totalorder %s112, %s113
    %p124 = scmp.eq.s32.totalorder %s15, 0
    %p125 = por %p123, %p124
    %p126 = scmp.ne.s32.totalorder %s112, %s113
    %p127 = scmp.eq.s32.totalorder %s16, 1
    %p128 = por %p126, %p127
    %p130 = scmp.ne.s32.totalorder %s113, %s129
    %p131 = scmp.eq.s32.totalorder %s16, 0
    %p132 = por %p130, %p131
    %p133 = scmp.le.s32.totalorder 1, %s10
    %p134 = scmp.lt.s32.totalorder %s10, 3
    %p135 = pnand %p133, %p134
    %p136 = pneg %p135
    // Predicated region
    $region9: #{conv_init3_forward.1} parent=5 // pred_check
      _
    $region10: #{conv_init3_forward.1} parent=5 // pred_check_branch
      %138 = sbr.rel (%p135) target = $region12
    $region11: #{conv_init3_forward.1} parent=5 // pred_region
      %s139 = ssub.s32 %s10, 1
      // Predicated region
      $region13: #{conv_init3_forward.1} parent=11 // pred_check
        %p140 = pneg %p57
      $region14: #{conv_init3_forward.1} parent=11 // pred_check_branch
        %142 = sbr.rel (%p140) target = $region16
      $region15: #{conv_init3_forward.1} parent=11 // pred_region
        _
      $region16: #{conv_init3_forward.1} parent=11 // pred_fallthru
        _
      // Predicated region
      $region17: #{conv_init3_forward.1} parent=11 // pred_check
        %p143 = pneg %p78
      $region18: #{conv_init3_forward.1} parent=11 // pred_check_branch
        %145 = sbr.rel (%p143) target = $region20
      $region19: #{conv_init3_forward.1} parent=11 // pred_region
        _
      $region20: #{conv_init3_forward.1} parent=11 // pred_fallthru
        _
      // Predicated region
      $region21: #{conv_init3_forward.1} parent=11 // pred_check
        %p146 = pneg %p99
      $region22: #{conv_init3_forward.1} parent=11 // pred_check_branch
        %148 = sbr.rel (%p146) target = $region24
      $region23: #{conv_init3_forward.1} parent=11 // pred_region
        _
      $region24: #{conv_init3_forward.1} parent=11 // pred_fallthru
        _
    $region12: #{conv_init3_forward.1} parent=5 // pred_fallthru
      _
    %p149 = scmp.lt.s32.totalorder %s10, 2
    // Predicated region
    $region25: #{conv_init3_forward.1} parent=5 // pred_check
      %p150 = pneg %p149
    $region26: #{conv_init3_forward.1} parent=5 // pred_check_branch
      %152 = sbr.rel (%p150) target = $region28
    $region27: #{conv_init3_forward.1} parent=5 // pred_region
      // Predicated region
      $region29: #{conv_init3_forward.1} parent=27 // pred_check
        %p153 = pneg %p30
      $region30: #{conv_init3_forward.1} parent=27 // pred_check_branch
        %155 = sbr.rel (%p153) target = $region32
      $region31: #{conv_init3_forward.1} parent=27 // pred_region
        %p156 = scmp.lt.s32.totalorder %s10, 1
        %s157 = scalar_select %p156, %s10, 1
        %s158 = smul.addr %s157, 56
        %s159 = smul.addr %s158, 8
        %s160 = scalar_lea.vmem %s0, %s159
      $region32: #{conv_init3_forward.1} parent=27 // pred_fallthru
        _
    $region28: #{conv_init3_forward.1} parent=5 // pred_fallthru
      _
    %p161 = scmp.le.s32.totalorder 1, %s10
    %p162 = scmp.lt.s32.totalorder %s10, 3
    %p163 = pnand %p161, %p162
    %p164 = pneg %p163
    // Predicated region
    $region33: #{conv_init3_forward.1} parent=5 // pred_check
      _
    $region34: #{conv_init3_forward.1} parent=5 // pred_check_branch
      %166 = sbr.rel (%p163) target = $region36
    $region35: #{conv_init3_forward.1} parent=5 // pred_region
      %s167 = ssub.s32 %s10, 1
      %p168 = scmp.lt.s32.totalorder %s15, 1
      %s169 = scalar_select %p168, %s15, 1
      %s170 = smul.addr %s169, 56
      %s171 = smul.addr %s170, 8
      %s172 = scalar_lea.vmem %s0, %s171
      %p173 = pneg %p36
      %p174 = pneg %p33
      %p175 = pneg %p57
      %p176 = pneg %p54
      %p177 = pneg %p78
      %p178 = pneg %p75
      %p179 = pneg %p99
      %p180 = pneg %p96
      %p181 = pneg %p125
      %p182 = pneg %p122
      %p183 = scmp.lt.s32.totalorder %s15, 1
      %s184 = scalar_select %p183, %s15, 1
      %s185 = smul.addr %s184, 24
      %s186 = smul.addr %s185, 8
      %s187 = scalar_lea.vmem %s4, %s186
      %p188 = scmp.lt.s32.totalorder %s15, 1
      %s189 = scalar_select %p188, %s15, 1
      %s190 = smul.addr %s189, 56
      %s191 = smul.addr %s190, 8
      %s192 = scalar_lea.vmem %s0, %s191
      %p193 = scmp.lt.s32.totalorder %s15, 1
      %s194 = scalar_select %p193, %s15, 1
      %s195 = smul.addr %s194, 24
      %s196 = smul.addr %s195, 8
      %s197 = scalar_lea.vmem %s4, %s196
      %v198 = vld [vmem:[%s192] sm:$0xff]
      %v199 = vld [vmem:[%s192 + $0x8] sm:$0xff]
      %v200 = vld [vmem:[%s192 + $0x10] sm:$0xff]
      %v201 = vld [vmem:[%s192 + $0x18] sm:$0xff]
      %v202 = vld [vmem:[%s192 + $0x20] sm:$0xff]
      %v203 = vld [vmem:[%s192 + $0x28] sm:$0xff]
      %v204 = vld [vmem:[%s192 + $0x30] sm:$0xff]
      %v205 = vld [vmem:[%s192 + $0x38] sm:$0xff]
      %v206 = vld [vmem:[%s192 + $0x40] sm:$0xff]
      %v207 = vld [vmem:[%s192 + $0x48] sm:$0xff]
      %v208 = vld [vmem:[%s192 + $0x50] sm:$0xff]
      %v209 = vld [vmem:[%s192 + $0x58] sm:$0xff]
      %v210 = vld [vmem:[%s192 + $0x60] sm:$0xff]
      %v211 = vld [vmem:[%s192 + $0x68] sm:$0xff]
      %v212 = vld [vmem:[%s192 + $0x70] sm:$0xff]
      %v213 = vld [vmem:[%s192 + $0x78] sm:$0xff]
      %v214 = vld [vmem:[%s192 + $0x80] sm:$0xff]
      %v215 = vld [vmem:[%s192 + $0x88] sm:$0xff]
      %v216 = vld [vmem:[%s192 + $0x90] sm:$0xff]
      %v217 = vld [vmem:[%s192 + $0x98] sm:$0xff]
      %v218 = vld [vmem:[%s192 + $0xa0] sm:$0xff]
      %v219 = vld [vmem:[%s192 + $0xa8] sm:$0xff]
      %v220 = vld [vmem:[%s192 + $0xb0] sm:$0xff]
      %v221 = vld [vmem:[%s192 + $0xb8] sm:$0xff]
      %v222 = vld [vmem:[%s192 + $0xc0] sm:$0xff]
      %v223 = vld [vmem:[%s192 + $0xc8] sm:$0xff]
      %v224 = vld [vmem:[%s192 + $0xd0] sm:$0xff]
      %v225 = vld [vmem:[%s192 + $0xd8] sm:$0xff]
      %v226 = vld [vmem:[%s192 + $0xe0] sm:$0xff]
      %v227 = vld [vmem:[%s192 + $0xe8] sm:$0xff]
      %v228 = vld [vmem:[%s192 + $0xf0] sm:$0xff]
      %v229 = vld [vmem:[%s192 + $0xf8] sm:$0xff]
      %v230 = vld [vmem:[%s192 + $0x100] sm:$0xff]
      %v231 = vld [vmem:[%s192 + $0x108] sm:$0xff]
      %v232 = vld [vmem:[%s192 + $0x110] sm:$0xff]
      %v233 = vld [vmem:[%s192 + $0x118] sm:$0xff]
      %v234 = vld [vmem:[%s192 + $0x120] sm:$0xff]
      %v235 = vld [vmem:[%s192 + $0x128] sm:$0xff]
      %v236 = vld [vmem:[%s192 + $0x130] sm:$0xff]
      %v237 = vld [vmem:[%s192 + $0x138] sm:$0xff]
      %v238 = vld [vmem:[%s192 + $0x140] sm:$0xff]
      %v239 = vld [vmem:[%s192 + $0x148] sm:$0xff]
      %v240 = vld [vmem:[%s192 + $0x150] sm:$0xff]
      %v241 = vld [vmem:[%s192 + $0x158] sm:$0xff]
      %v242 = vld [vmem:[%s192 + $0x160] sm:$0xff]
      %v243 = vld [vmem:[%s192 + $0x168] sm:$0xff]
      %v244 = vld [vmem:[%s192 + $0x170] sm:$0xff]
      %v245 = vld [vmem:[%s192 + $0x178] sm:$0xff]
      %v246 = vld [vmem:[%s192 + $0x180] sm:$0xff]
      %v247 = vld [vmem:[%s192 + $0x188] sm:$0xff]
      %v248 = vld [vmem:[%s192 + $0x190] sm:$0xff]
      %v249 = vld [vmem:[%s192 + $0x198] sm:$0xff]
      %v250 = vld [vmem:[%s192 + $0x1a0] sm:$0xff]
      %v251 = vld [vmem:[%s192 + $0x1a8] sm:$0xff]
      %v252 = vld [vmem:[%s192 + $0x1b0] sm:$0xff]
      %v253 = vld [vmem:[%s192 + $0x1b8] sm:$0xff]
      %v254 = vld [vmem:[%s1] sm:$0xff]
      %v255 = vld [vmem:[%s1 + $0x8] sm:$0xff]
      %v256 = vld [vmem:[%s1 + $0x10] sm:$0xff]
      %v257 = vld [vmem:[%s1 + $0x18] sm:$0xff]
      %vm258 = vcmask 261120
      %v260 = vsel %vm258, %v198, 0
      %v263 = vsel %vm258, %v199, 0
      %v266 = vsel %vm258, %v200, 0
      %v269 = vsel %vm258, %v201, 0
      %v272 = vsel %vm258, %v202, 0
      %v275 = vsel %vm258, %v203, 0
      %v278 = vsel %vm258, %v204, 0
      %v281 = vsel %vm258, %v205, 0
      %v284 = vsel %vm258, %v206, 0
      %v287 = vsel %vm258, %v207, 0
      %v290 = vsel %vm258, %v208, 0
      %v293 = vsel %vm258, %v209, 0
      %v296 = vsel %vm258, %v210, 0
      %v299 = vsel %vm258, %v211, 0
      %v302 = vsel %vm258, %v212, 0
      %v305 = vsel %vm258, %v213, 0
      %v308 = vsel %vm258, %v214, 0
      %v311 = vsel %vm258, %v215, 0
      %v314 = vsel %vm258, %v216, 0
      %v317 = vsel %vm258, %v217, 0
      %v320 = vsel %vm258, %v218, 0
      %v323 = vsel %vm258, %v219, 0
      %v326 = vsel %vm258, %v220, 0
      %v329 = vsel %vm258, %v221, 0
      %v332 = vsel %vm258, %v222, 0
      %v335 = vsel %vm258, %v223, 0
      %v338 = vsel %vm258, %v224, 0
      %v341 = vsel %vm258, %v225, 0
      %v344 = vsel %vm258, %v226, 0
      %v347 = vsel %vm258, %v227, 0
      %v350 = vsel %vm258, %v228, 0
      %v353 = vsel %vm258, %v229, 0
      %v356 = vsel %vm258, %v230, 0
      %v359 = vsel %vm258, %v231, 0
      %v362 = vsel %vm258, %v232, 0
      %v365 = vsel %vm258, %v233, 0
      %v368 = vsel %vm258, %v234, 0
      %v371 = vsel %vm258, %v235, 0
      %v374 = vsel %vm258, %v236, 0
      %v377 = vsel %vm258, %v237, 0
      %v380 = vsel %vm258, %v238, 0
      %v383 = vsel %vm258, %v239, 0
      %v386 = vsel %vm258, %v240, 0
      %v389 = vsel %vm258, %v241, 0
      %v392 = vsel %vm258, %v242, 0
      %v395 = vsel %vm258, %v243, 0
      %v398 = vsel %vm258, %v244, 0
      %v401 = vsel %vm258, %v245, 0
      %v404 = vsel %vm258, %v246, 0
      %v407 = vsel %vm258, %v247, 0
      %v410 = vsel %vm258, %v248, 0
      %v413 = vsel %vm258, %v249, 0
      %v416 = vsel %vm258, %v250, 0
      %v419 = vsel %vm258, %v251, 0
      %v422 = vsel %vm258, %v252, 0
      %v425 = vsel %vm258, %v253, 0
      %427 = vmatprep.subr.mxu0 0.0
      %428 = vmatpush1.msra.mxu0 0.0
      %429 = vmatprep.subr.mxu0 0.0
      %430 = vmatpush1.msra.mxu0 0.0
      %431 = vmatprep.subr.mxu0 0.0
      %432 = vmatpush1.msra.mxu0 0.0
      %433 = vmatprep.subr.mxu0 0.0
      %434 = vmatpush1.msra.mxu0 0.0
      %435 = vmatprep.subr.mxu0 0.0
      %436 = vmatpush1.msra.mxu0 0.0
      %437 = vmatprep.subr.mxu0 0.0
      %438 = vmatpush1.msra.mxu0 0.0
      %439 = vmatprep.subr.mxu0 0.0
      %440 = vmatpush1.msra.mxu0 0.0
      %441 = vmatprep.subr.mxu0 0.0
      %442 = vmatpush1.msra.mxu0 0.0
      %443 = vmatprep.subr.mxu0 0.0
      %444 = vmatpush1.msra.mxu0 0.0
      %445 = vmatprep.subr.mxu0 0.0
      %446 = vmatpush1.msra.mxu0 0.0
      %447 = vmatprep.subr.mxu0 0.0
      %448 = vmatpush1.msra.mxu0 0.0
      %449 = vmatprep.subr.mxu0 0.0
      %450 = vmatpush1.msra.mxu0 0.0
      %451 = vmatprep.subr.mxu0 0.0
      %452 = vmatpush1.msra.mxu0 %v257
      %453 = vmatprep.subr.mxu0 0.0
      %454 = vmatpush1.msra.mxu0 %v256
      %455 = vmatprep.subr.mxu0 0.0
      %456 = vmatpush1.msra.mxu0 %v255
      %457 = vmatprep.subr.mxu0 0.0
      %458 = vmatpush1.msra.mxu0 %v254
      %459 = vmatprep.subr.mxu0 0.0
      %460 = vmatpush2.msra.mxu0 0.0
      %461 = vmatprep.subr.mxu0 0.0
      %462 = vmatpush2.msra.mxu0 0.0
      %463 = vmatprep.subr.mxu0 0.0
      %464 = vmatpush2.msra.mxu0 0.0
      %465 = vmatprep.subr.mxu0 0.0
      %466 = vmatpush2.msra.mxu0 0.0
      %467 = vmatprep.subr.mxu0 0.0
      %468 = vmatpush2.msra.mxu0 0.0
      %469 = vmatprep.subr.mxu0 0.0
      %470 = vmatpush2.msra.mxu0 0.0
      %471 = vmatprep.subr.mxu0 0.0
      %472 = vmatpush2.msra.mxu0 0.0
      %473 = vmatprep.subr.mxu0 0.0
      %474 = vmatpush2.msra.mxu0 0.0
      %475 = vmatprep.subr.mxu0 0.0
      %476 = vmatpush2.msra.mxu0 0.0
      %477 = vmatprep.subr.mxu0 0.0
      %478 = vmatpush2.msra.mxu0 0.0
      %479 = vmatprep.subr.mxu0 0.0
      %480 = vmatpush2.msra.mxu0 0.0
      %481 = vmatprep.subr.mxu0 0.0
      %482 = vmatpush2.msra.mxu0 0.0
      %483 = vmatprep.subr.mxu0 0.0
      %484 = vmatpush2.msra.mxu0 0.0
      %485 = vmatprep.subr.mxu0 0.0
      %486 = vmatpush2.msra.mxu0 0.0
      %487 = vmatprep.subr.mxu0 0.0
      %488 = vmatpush2.msra.mxu0 0.0
      %489 = vmatprep.subr.mxu0 0.0
      %490 = vmatpush2.msra.mxu0 0.0
      %491 = vmatprep.mubr.f32.mxu0 0.0
      %492 = vmatmul.mubr.f32.gmra.mxu0 %v260
      %v493 = vpop.f32.mrf.mxu0
      %v494 = vadd.f32 0.0, %v493
      %v495 = vpop.f32.mrf.mxu0
      %496 = vmatprep.mubr.f32.mxu0 0.0
      %497 = vmatmul.mubr.f32.gmra.mxu0 %v263
      %v498 = vpop.f32.mrf.mxu0
      %v499 = vadd.f32 0.0, %v498
      %v500 = vpop.f32.mrf.mxu0
      %501 = vmatprep.mubr.f32.mxu0 0.0
      %502 = vmatmul.mubr.f32.gmra.mxu0 %v266
      %v503 = vpop.f32.mrf.mxu0
      %v504 = vadd.f32 0.0, %v503
      %v505 = vpop.f32.mrf.mxu0
      %506 = vmatprep.mubr.f32.mxu0 0.0
      %507 = vmatmul.mubr.f32.gmra.mxu0 %v269
      %v508 = vpop.f32.mrf.mxu0
      %v509 = vadd.f32 0.0, %v508
      %v510 = vpop.f32.mrf.mxu0
      %511 = vmatprep.mubr.f32.mxu0 0.0
      %512 = vmatmul.mubr.f32.gmra.mxu0 %v272
      %v513 = vpop.f32.mrf.mxu0
      %v514 = vadd.f32 0.0, %v513
      %v515 = vpop.f32.mrf.mxu0
      %516 = vmatprep.mubr.f32.mxu0 0.0
      %517 = vmatmul.mubr.f32.gmra.mxu0 %v275
      %v518 = vpop.f32.mrf.mxu0
      %v519 = vadd.f32 0.0, %v518
      %v520 = vpop.f32.mrf.mxu0
      %521 = vmatprep.mubr.f32.mxu0 0.0
      %522 = vmatmul.mubr.f32.gmra.mxu0 %v278
      %v523 = vpop.f32.mrf.mxu0
      %v524 = vadd.f32 0.0, %v523
      %v525 = vpop.f32.mrf.mxu0
      %526 = vmatprep.mubr.f32.mxu0 0.0
      %527 = vmatmul.mubr.f32.gmra.mxu0 %v281
      %v528 = vpop.f32.mrf.mxu0
      %v529 = vadd.f32 0.0, %v528
      %v530 = vpop.f32.mrf.mxu0
      %531 = vmatprep.mubr.f32.mxu0 0.0
      %532 = vmatmul.mubr.f32.gmra.mxu0 %v284
      %v533 = vpop.f32.mrf.mxu0
      %v534 = vadd.f32 0.0, %v533
      %v535 = vpop.f32.mrf.mxu0
      %536 = vmatprep.mubr.f32.mxu0 0.0
      %537 = vmatmul.mubr.f32.gmra.mxu0 %v287
      %v538 = vpop.f32.mrf.mxu0
      %v539 = vadd.f32 0.0, %v538
      %v540 = vpop.f32.mrf.mxu0
      %541 = vmatprep.mubr.f32.mxu0 0.0
      %542 = vmatmul.mubr.f32.gmra.mxu0 %v290
      %v543 = vpop.f32.mrf.mxu0
      %v544 = vadd.f32 0.0, %v543
      %v545 = vpop.f32.mrf.mxu0
      %546 = vmatprep.mubr.f32.mxu0 0.0
      %547 = vmatmul.mubr.f32.gmra.mxu0 %v293
      %v548 = vpop.f32.mrf.mxu0
      %v549 = vadd.f32 0.0, %v548
      %v550 = vpop.f32.mrf.mxu0
      %551 = vmatprep.mubr.f32.mxu0 0.0
      %552 = vmatmul.mubr.f32.gmra.mxu0 %v296
      %v553 = vpop.f32.mrf.mxu0
      %v554 = vadd.f32 0.0, %v553
      %v555 = vpop.f32.mrf.mxu0
      %556 = vmatprep.mubr.f32.mxu0 0.0
      %557 = vmatmul.mubr.f32.gmra.mxu0 %v299
      %v558 = vpop.f32.mrf.mxu0
      %v559 = vadd.f32 0.0, %v558
      %v560 = vpop.f32.mrf.mxu0
      %561 = vmatprep.mubr.f32.mxu0 0.0
      %562 = vmatmul.mubr.f32.gmra.mxu0 %v302
      %v563 = vpop.f32.mrf.mxu0
      %v564 = vadd.f32 0.0, %v563
      %v565 = vpop.f32.mrf.mxu0
      %566 = vmatprep.mubr.f32.mxu0 0.0
      %567 = vmatmul.mubr.f32.gmra.mxu0 %v305
      %v568 = vpop.f32.mrf.mxu0
      %v569 = vadd.f32 0.0, %v568
      %v570 = vpop.f32.mrf.mxu0
      %571 = vmatprep.mubr.f32.mxu0 0.0
      %572 = vmatmul.mubr.f32.gmra.mxu0 %v308
      %v573 = vpop.f32.mrf.mxu0
      %v574 = vadd.f32 0.0, %v573
      %v575 = vpop.f32.mrf.mxu0
      %576 = vmatprep.mubr.f32.mxu0 0.0
      %577 = vmatmul.mubr.f32.gmra.mxu0 %v311
      %v578 = vpop.f32.mrf.mxu0
      %v579 = vadd.f32 0.0, %v578
      %v580 = vpop.f32.mrf.mxu0
      %581 = vmatprep.mubr.f32.mxu0 0.0
      %582 = vmatmul.mubr.f32.gmra.mxu0 %v314
      %v583 = vpop.f32.mrf.mxu0
      %v584 = vadd.f32 0.0, %v583
      %v585 = vpop.f32.mrf.mxu0
      %586 = vmatprep.mubr.f32.mxu0 0.0
      %587 = vmatmul.mubr.f32.gmra.mxu0 %v317
      %v588 = vpop.f32.mrf.mxu0
      %v589 = vadd.f32 0.0, %v588
      %v590 = vpop.f32.mrf.mxu0
      %591 = vmatprep.mubr.f32.mxu0 0.0
      %592 = vmatmul.mubr.f32.gmra.mxu0 %v320
      %v593 = vpop.f32.mrf.mxu0
      %v594 = vadd.f32 0.0, %v593
      %v595 = vpop.f32.mrf.mxu0
      %596 = vmatprep.mubr.f32.mxu0 0.0
      %597 = vmatmul.mubr.f32.gmra.mxu0 %v323
      %v598 = vpop.f32.mrf.mxu0
      %v599 = vadd.f32 0.0, %v598
      %v600 = vpop.f32.mrf.mxu0
      %601 = vmatprep.mubr.f32.mxu0 0.0
      %602 = vmatmul.mubr.f32.gmra.mxu0 %v326
      %v603 = vpop.f32.mrf.mxu0
      %v604 = vadd.f32 0.0, %v603
      %v605 = vpop.f32.mrf.mxu0
      %606 = vmatprep.mubr.f32.mxu0 0.0
      %607 = vmatmul.mubr.f32.gmra.mxu0 %v329
      %v608 = vpop.f32.mrf.mxu0
      %v609 = vadd.f32 0.0, %v608
      %v610 = vpop.f32.mrf.mxu0
      %611 = vmatprep.mubr.f32.mxu0 0.0
      %612 = vmatmul.mubr.f32.gmra.mxu0 %v332
      %v613 = vpop.f32.mrf.mxu0
      %v614 = vadd.f32 0.0, %v613
      %v615 = vpop.f32.mrf.mxu0
      %616 = vmatprep.mubr.f32.mxu0 0.0
      %617 = vmatmul.mubr.f32.gmra.mxu0 %v335
      %v618 = vpop.f32.mrf.mxu0
      %v619 = vadd.f32 0.0, %v618
      %v620 = vpop.f32.mrf.mxu0
      %621 = vmatprep.mubr.f32.mxu0 0.0
      %622 = vmatmul.mubr.f32.gmra.mxu0 %v338
      %v623 = vpop.f32.mrf.mxu0
      %v624 = vadd.f32 0.0, %v623
      %v625 = vpop.f32.mrf.mxu0
      %626 = vmatprep.mubr.f32.mxu0 0.0
      %627 = vmatmul.mubr.f32.gmra.mxu0 %v341
      %v628 = vpop.f32.mrf.mxu0
      %v629 = vadd.f32 0.0, %v628
      %v630 = vpop.f32.mrf.mxu0
      %631 = vmatprep.mubr.f32.mxu0 0.0
      %632 = vmatmul.mubr.f32.gmra.mxu0 %v344
      %v633 = vpop.f32.mrf.mxu0
      %v634 = vadd.f32 0.0, %v633
      %v635 = vpop.f32.mrf.mxu0
      %636 = vmatprep.mubr.f32.mxu0 0.0
      %637 = vmatmul.mubr.f32.gmra.mxu0 %v347
      %v638 = vpop.f32.mrf.mxu0
      %v639 = vadd.f32 0.0, %v638
      %v640 = vpop.f32.mrf.mxu0
      %641 = vmatprep.mubr.f32.mxu0 0.0
      %642 = vmatmul.mubr.f32.gmra.mxu0 %v350
      %v643 = vpop.f32.mrf.mxu0
      %v644 = vadd.f32 0.0, %v643
      %v645 = vpop.f32.mrf.mxu0
      %646 = vmatprep.mubr.f32.mxu0 0.0
      %647 = vmatmul.mubr.f32.gmra.mxu0 %v353
      %v648 = vpop.f32.mrf.mxu0
      %v649 = vadd.f32 0.0, %v648
      %v650 = vpop.f32.mrf.mxu0
      %651 = vmatprep.mubr.f32.mxu0 0.0
      %652 = vmatmul.mubr.f32.gmra.mxu0 %v356
      %v653 = vpop.f32.mrf.mxu0
      %v654 = vadd.f32 0.0, %v653
      %v655 = vpop.f32.mrf.mxu0
      %656 = vmatprep.mubr.f32.mxu0 0.0
      %657 = vmatmul.mubr.f32.gmra.mxu0 %v359
      %v658 = vpop.f32.mrf.mxu0
      %v659 = vadd.f32 0.0, %v658
      %v660 = vpop.f32.mrf.mxu0
      %661 = vmatprep.mubr.f32.mxu0 0.0
      %662 = vmatmul.mubr.f32.gmra.mxu0 %v362
      %v663 = vpop.f32.mrf.mxu0
      %v664 = vadd.f32 0.0, %v663
      %v665 = vpop.f32.mrf.mxu0
      %666 = vmatprep.mubr.f32.mxu0 0.0
      %667 = vmatmul.mubr.f32.gmra.mxu0 %v365
      %v668 = vpop.f32.mrf.mxu0
      %v669 = vadd.f32 0.0, %v668
      %v670 = vpop.f32.mrf.mxu0
      %671 = vmatprep.mubr.f32.mxu0 0.0
      %672 = vmatmul.mubr.f32.gmra.mxu0 %v368
      %v673 = vpop.f32.mrf.mxu0
      %v674 = vadd.f32 0.0, %v673
      %v675 = vpop.f32.mrf.mxu0
      %676 = vmatprep.mubr.f32.mxu0 0.0
      %677 = vmatmul.mubr.f32.gmra.mxu0 %v371
      %v678 = vpop.f32.mrf.mxu0
      %v679 = vadd.f32 0.0, %v678
      %v680 = vpop.f32.mrf.mxu0
      %681 = vmatprep.mubr.f32.mxu0 0.0
      %682 = vmatmul.mubr.f32.gmra.mxu0 %v374
      %v683 = vpop.f32.mrf.mxu0
      %v684 = vadd.f32 0.0, %v683
      %v685 = vpop.f32.mrf.mxu0
      %686 = vmatprep.mubr.f32.mxu0 0.0
      %687 = vmatmul.mubr.f32.gmra.mxu0 %v377
      %v688 = vpop.f32.mrf.mxu0
      %v689 = vadd.f32 0.0, %v688
      %v690 = vpop.f32.mrf.mxu0
      %691 = vmatprep.mubr.f32.mxu0 0.0
      %692 = vmatmul.mubr.f32.gmra.mxu0 %v380
      %v693 = vpop.f32.mrf.mxu0
      %v694 = vadd.f32 0.0, %v693
      %v695 = vpop.f32.mrf.mxu0
      %696 = vmatprep.mubr.f32.mxu0 0.0
      %697 = vmatmul.mubr.f32.gmra.mxu0 %v383
      %v698 = vpop.f32.mrf.mxu0
      %v699 = vadd.f32 0.0, %v698
      %v700 = vpop.f32.mrf.mxu0
      %701 = vmatprep.mubr.f32.mxu0 0.0
      %702 = vmatmul.mubr.f32.gmra.mxu0 %v386
      %v703 = vpop.f32.mrf.mxu0
      %v704 = vadd.f32 0.0, %v703
      %v705 = vpop.f32.mrf.mxu0
      %706 = vmatprep.mubr.f32.mxu0 0.0
      %707 = vmatmul.mubr.f32.gmra.mxu0 %v389
      %v708 = vpop.f32.mrf.mxu0
      %v709 = vadd.f32 0.0, %v708
      %v710 = vpop.f32.mrf.mxu0
      %711 = vmatprep.mubr.f32.mxu0 0.0
      %712 = vmatmul.mubr.f32.gmra.mxu0 %v392
      %v713 = vpop.f32.mrf.mxu0
      %v714 = vadd.f32 0.0, %v713
      %v715 = vpop.f32.mrf.mxu0
      %716 = vmatprep.mubr.f32.mxu0 0.0
      %717 = vmatmul.mubr.f32.gmra.mxu0 %v395
      %v718 = vpop.f32.mrf.mxu0
      %v719 = vadd.f32 0.0, %v718
      %v720 = vpop.f32.mrf.mxu0
      %721 = vmatprep.mubr.f32.mxu0 0.0
      %722 = vmatmul.mubr.f32.gmra.mxu0 %v398
      %v723 = vpop.f32.mrf.mxu0
      %v724 = vadd.f32 0.0, %v723
      %v725 = vpop.f32.mrf.mxu0
      %726 = vmatprep.mubr.f32.mxu0 0.0
      %727 = vmatmul.mubr.f32.gmra.mxu0 %v401
      %v728 = vpop.f32.mrf.mxu0
      %v729 = vadd.f32 0.0, %v728
      %v730 = vpop.f32.mrf.mxu0
      %731 = vmatprep.mubr.f32.mxu0 0.0
      %732 = vmatmul.mubr.f32.gmra.mxu0 %v404
      %v733 = vpop.f32.mrf.mxu0
      %v734 = vadd.f32 0.0, %v733
      %v735 = vpop.f32.mrf.mxu0
      %736 = vmatprep.mubr.f32.mxu0 0.0
      %737 = vmatmul.mubr.f32.gmra.mxu0 %v407
      %v738 = vpop.f32.mrf.mxu0
      %v739 = vadd.f32 0.0, %v738
      %v740 = vpop.f32.mrf.mxu0
      %741 = vmatprep.mubr.f32.mxu0 0.0
      %742 = vmatmul.mubr.f32.gmra.mxu0 %v410
      %v743 = vpop.f32.mrf.mxu0
      %v744 = vadd.f32 0.0, %v743
      %v745 = vpop.f32.mrf.mxu0
      %746 = vmatprep.mubr.f32.mxu0 0.0
      %747 = vmatmul.mubr.f32.gmra.mxu0 %v413
      %v748 = vpop.f32.mrf.mxu0
      %v749 = vadd.f32 0.0, %v748
      %v750 = vpop.f32.mrf.mxu0
      %751 = vmatprep.mubr.f32.mxu0 0.0
      %752 = vmatmul.mubr.f32.gmra.mxu0 %v416
      %v753 = vpop.f32.mrf.mxu0
      %v754 = vadd.f32 0.0, %v753
      %v755 = vpop.f32.mrf.mxu0
      %756 = vmatprep.mubr.f32.mxu0 0.0
      %757 = vmatmul.mubr.f32.gmra.mxu0 %v419
      %v758 = vpop.f32.mrf.mxu0
      %v759 = vadd.f32 0.0, %v758
      %v760 = vpop.f32.mrf.mxu0
      %761 = vmatprep.mubr.f32.mxu0 0.0
      %762 = vmatmul.mubr.f32.gmra.mxu0 %v422
      %v763 = vpop.f32.mrf.mxu0
      %v764 = vadd.f32 0.0, %v763
      %v765 = vpop.f32.mrf.mxu0
      %766 = vmatprep.mubr.f32.mxu0 0.0
      %767 = vmatmul.mubr.f32.gmra.mxu0 %v425
      %v768 = vpop.f32.mrf.mxu0
      %v769 = vadd.f32 0.0, %v768
      %v770 = vpop.f32.mrf.mxu0
      %771 = vdwg.mxu0
      %v772 = vmax.f32 %v494, 0.0
      %v773 = vmax.f32 %v499, 0.0
      %v774 = vmax.f32 %v504, 0.0
      %v775 = vmax.f32 %v509, 0.0
      %v776 = vmax.f32 %v514, 0.0
      %v777 = vmax.f32 %v519, 0.0
      %v778 = vmax.f32 %v524, 0.0
      %v779 = vmax.f32 %v529, 0.0
      %v780 = vmax.f32 %v534, 0.0
      %v781 = vmax.f32 %v539, 0.0
      %v782 = vmax.f32 %v544, 0.0
      %v783 = vmax.f32 %v549, 0.0
      %v784 = vmax.f32 %v554, 0.0
      %v785 = vmax.f32 %v559, 0.0
      %v786 = vmax.f32 %v564, 0.0
      %v787 = vmax.f32 %v569, 0.0
      %v788 = vmax.f32 %v574, 0.0
      %v789 = vmax.f32 %v579, 0.0
      %v790 = vmax.f32 %v584, 0.0
      %v791 = vmax.f32 %v589, 0.0
      %v792 = vmax.f32 %v594, 0.0
      %v793 = vmax.f32 %v599, 0.0
      %v794 = vmax.f32 %v604, 0.0
      %v795 = vmax.f32 %v609, 0.0
      %v796 = vmax.f32 %v614, 0.0
      %v797 = vmax.f32 %v619, 0.0
      %v798 = vmax.f32 %v624, 0.0
      %v799 = vmax.f32 %v629, 0.0
      %v800 = vmax.f32 %v634, 0.0
      %v801 = vmax.f32 %v639, 0.0
      %v802 = vmax.f32 %v644, 0.0
      %v803 = vmax.f32 %v649, 0.0
      %v804 = vmax.f32 %v654, 0.0
      %v805 = vmax.f32 %v659, 0.0
      %v806 = vmax.f32 %v664, 0.0
      %v807 = vmax.f32 %v669, 0.0
      %v808 = vmax.f32 %v674, 0.0
      %v809 = vmax.f32 %v679, 0.0
      %v810 = vmax.f32 %v684, 0.0
      %v811 = vmax.f32 %v689, 0.0
      %v812 = vmax.f32 %v694, 0.0
      %v813 = vmax.f32 %v699, 0.0
      %v814 = vmax.f32 %v704, 0.0
      %v815 = vmax.f32 %v709, 0.0
      %v816 = vmax.f32 %v714, 0.0
      %v817 = vmax.f32 %v719, 0.0
      %v818 = vmax.f32 %v724, 0.0
      %v819 = vmax.f32 %v729, 0.0
      %v820 = vmax.f32 %v734, 0.0
      %v821 = vmax.f32 %v739, 0.0
      %v822 = vmax.f32 %v744, 0.0
      %v823 = vmax.f32 %v749, 0.0
      %v824 = vmax.f32 %v754, 0.0
      %v825 = vmax.f32 %v759, 0.0
      %v826 = vmax.f32 %v764, 0.0
      %v827 = vmax.f32 %v769, 0.0
      %vm883 = vcmask 1040384
      %v884 = vrot.slane %v772, 7
      %v885 = vrot.slane %v773, 7
      %v886 = vsel %vm883, %v884, %v885
      %v887 = vrot.slane %v774, 7
      %v888 = vsel %vm883, %v885, %v887
      %v889 = vrot.slane %v775, 7
      %v890 = vsel %vm883, %v887, %v889
      %v891 = vrot.slane %v776, 7
      %v892 = vsel %vm883, %v889, %v891
      %v893 = vrot.slane %v777, 7
      %v894 = vsel %vm883, %v891, %v893
      %v895 = vrot.slane %v778, 7
      %v896 = vsel %vm883, %v893, %v895
      %v897 = vrot.slane %v779, 7
      %v898 = vsel %vm883, %v895, %v897
      %v899 = vrot.slane %v780, 7
      %v900 = vsel %vm883, %v897, %v899
      %v901 = vrot.slane %v781, 7
      %v902 = vsel %vm883, %v899, %v901
      %v903 = vrot.slane %v782, 7
      %v904 = vsel %vm883, %v901, %v903
      %v905 = vrot.slane %v783, 7
      %v906 = vsel %vm883, %v903, %v905
      %v907 = vrot.slane %v784, 7
      %v908 = vsel %vm883, %v905, %v907
      %v909 = vrot.slane %v785, 7
      %v910 = vsel %vm883, %v907, %v909
      %v911 = vrot.slane %v786, 7
      %v912 = vsel %vm883, %v909, %v911
      %v913 = vrot.slane %v787, 7
      %v914 = vsel %vm883, %v911, %v913
      %v915 = vrot.slane %v788, 7
      %v916 = vsel %vm883, %v913, %v915
      %v917 = vrot.slane %v789, 7
      %v918 = vsel %vm883, %v915, %v917
      %v919 = vrot.slane %v790, 7
      %v920 = vsel %vm883, %v917, %v919
      %v921 = vrot.slane %v791, 7
      %v922 = vsel %vm883, %v919, %v921
      %v923 = vrot.slane %v792, 7
      %v924 = vsel %vm883, %v921, %v923
      %v925 = vrot.slane %v793, 7
      %v926 = vsel %vm883, %v923, %v925
      %v927 = vrot.slane %v794, 7
      %v928 = vsel %vm883, %v925, %v927
      %v929 = vrot.slane %v795, 7
      %v930 = vsel %vm883, %v927, %v929
      %v931 = vrot.slane %v796, 7
      %v932 = vsel %vm883, %v929, %v931
      %v933 = vrot.slane %v797, 7
      %v934 = vsel %vm883, %v931, %v933
      %v935 = vrot.slane %v798, 7
      %v936 = vsel %vm883, %v933, %v935
      %v937 = vrot.slane %v799, 7
      %v938 = vsel %vm883, %v935, %v937
      %v939 = vrot.slane %v800, 7
      %v940 = vsel %vm883, %v937, %v939
      %v941 = vrot.slane %v801, 7
      %v942 = vsel %vm883, %v939, %v941
      %v943 = vrot.slane %v802, 7
      %v944 = vsel %vm883, %v941, %v943
      %v945 = vrot.slane %v803, 7
      %v946 = vsel %vm883, %v943, %v945
      %v947 = vrot.slane %v804, 7
      %v948 = vsel %vm883, %v945, %v947
      %v949 = vrot.slane %v805, 7
      %v950 = vsel %vm883, %v947, %v949
      %v951 = vrot.slane %v806, 7
      %v952 = vsel %vm883, %v949, %v951
      %v953 = vrot.slane %v807, 7
      %v954 = vsel %vm883, %v951, %v953
      %v955 = vrot.slane %v808, 7
      %v956 = vsel %vm883, %v953, %v955
      %v957 = vrot.slane %v809, 7
      %v958 = vsel %vm883, %v955, %v957
      %v959 = vrot.slane %v810, 7
      %v960 = vsel %vm883, %v957, %v959
      %v961 = vrot.slane %v811, 7
      %v962 = vsel %vm883, %v959, %v961
      %v963 = vrot.slane %v812, 7
      %v964 = vsel %vm883, %v961, %v963
      %v965 = vrot.slane %v813, 7
      %v966 = vsel %vm883, %v963, %v965
      %v967 = vrot.slane %v814, 7
      %v968 = vsel %vm883, %v965, %v967
      %v969 = vrot.slane %v815, 7
      %v970 = vsel %vm883, %v967, %v969
      %v971 = vrot.slane %v816, 7
      %v972 = vsel %vm883, %v969, %v971
      %v973 = vrot.slane %v817, 7
      %v974 = vsel %vm883, %v971, %v973
      %v975 = vrot.slane %v818, 7
      %v976 = vsel %vm883, %v973, %v975
      %v977 = vrot.slane %v819, 7
      %v978 = vsel %vm883, %v975, %v977
      %v979 = vrot.slane %v820, 7
      %v980 = vsel %vm883, %v977, %v979
      %v981 = vrot.slane %v821, 7
      %v982 = vsel %vm883, %v979, %v981
      %v983 = vrot.slane %v822, 7
      %v984 = vsel %vm883, %v981, %v983
      %v985 = vrot.slane %v823, 7
      %v986 = vsel %vm883, %v983, %v985
      %v987 = vrot.slane %v824, 7
      %v988 = vsel %vm883, %v985, %v987
      %v989 = vrot.slane %v825, 7
      %v990 = vsel %vm883, %v987, %v989
      %v991 = vrot.slane %v826, 7
      %v992 = vsel %vm883, %v989, %v991
      %vm1047 = vcmask 523264
      %1048 = vst.msk [vmem:[#allocation2] sm:$0xff] %vm1047, %v886
      %1049 = vst.msk [vmem:[#allocation2 + $0x10] sm:$0xff] %vm1047, %v888
      %1050 = vst.msk [vmem:[#allocation2 + $0x20] sm:$0xff] %vm1047, %v890
      %1051 = vst.msk [vmem:[#allocation2 + $0x30] sm:$0xff] %vm1047, %v892
      %1052 = vst.msk [vmem:[#allocation2 + $0x40] sm:$0xff] %vm1047, %v894
      %1053 = vst.msk [vmem:[#allocation2 + $0x50] sm:$0xff] %vm1047, %v896
      %1054 = vst.msk [vmem:[#allocation2 + $0x60] sm:$0xff] %vm1047, %v898
      %1055 = vst.msk [vmem:[#allocation2 + $0x70] sm:$0xff] %vm1047, %v900
      %1056 = vst.msk [vmem:[#allocation2 + $0x80] sm:$0xff] %vm1047, %v902
      %1057 = vst.msk [vmem:[#allocation2 + $0x90] sm:$0xff] %vm1047, %v904
      %1058 = vst.msk [vmem:[#allocation2 + $0xa0] sm:$0xff] %vm1047, %v906
      %1059 = vst.msk [vmem:[#allocation2 + $0xb0] sm:$0xff] %vm1047, %v908
      %1060 = vst.msk [vmem:[#allocation2 + $0xc0] sm:$0xff] %vm1047, %v910
      %1061 = vst.msk [vmem:[#allocation2 + $0xd0] sm:$0xff] %vm1047, %v912
      %1062 = vst.msk [vmem:[#allocation2 + $0xe0] sm:$0xff] %vm1047, %v914
      %1063 = vst.msk [vmem:[#allocation2 + $0xf0] sm:$0xff] %vm1047, %v916
      %1064 = vst.msk [vmem:[#allocation2 + $0x100] sm:$0xff] %vm1047, %v918
      %1065 = vst.msk [vmem:[#allocation2 + $0x110] sm:$0xff] %vm1047, %v920
      %1066 = vst.msk [vmem:[#allocation2 + $0x120] sm:$0xff] %vm1047, %v922
      %1067 = vst.msk [vmem:[#allocation2 + $0x130] sm:$0xff] %vm1047, %v924
      %1068 = vst.msk [vmem:[#allocation2 + $0x140] sm:$0xff] %vm1047, %v926
      %1069 = vst.msk [vmem:[#allocation2 + $0x150] sm:$0xff] %vm1047, %v928
      %1070 = vst.msk [vmem:[#allocation2 + $0x160] sm:$0xff] %vm1047, %v930
      %1071 = vst.msk [vmem:[#allocation2 + $0x170] sm:$0xff] %vm1047, %v932
      %1072 = vst.msk [vmem:[#allocation2 + $0x180] sm:$0xff] %vm1047, %v934
      %1073 = vst.msk [vmem:[#allocation2 + $0x190] sm:$0xff] %vm1047, %v936
      %1074 = vst.msk [vmem:[#allocation2 + $0x1a0] sm:$0xff] %vm1047, %v938
      %1075 = vst.msk [vmem:[#allocation2 + $0x1b0] sm:$0xff] %vm1047, %v940
      %1076 = vst.msk [vmem:[#allocation2 + $0x1c0] sm:$0xff] %vm1047, %v942
      %1077 = vst.msk [vmem:[#allocation2 + $0x1d0] sm:$0xff] %vm1047, %v944
      %1078 = vst.msk [vmem:[#allocation2 + $0x1e0] sm:$0xff] %vm1047, %v946
      %1079 = vst.msk [vmem:[#allocation2 + $0x1f0] sm:$0xff] %vm1047, %v948
      %1080 = vst.msk [vmem:[#allocation2 + $0x200] sm:$0xff] %vm1047, %v950
      %1081 = vst.msk [vmem:[#allocation2 + $0x210] sm:$0xff] %vm1047, %v952
      %1082 = vst.msk [vmem:[#allocation2 + $0x220] sm:$0xff] %vm1047, %v954
      %1083 = vst.msk [vmem:[#allocation2 + $0x230] sm:$0xff] %vm1047, %v956
      %1084 = vst.msk [vmem:[#allocation2 + $0x240] sm:$0xff] %vm1047, %v958
      %1085 = vst.msk [vmem:[#allocation2 + $0x250] sm:$0xff] %vm1047, %v960
      %1086 = vst.msk [vmem:[#allocation2 + $0x260] sm:$0xff] %vm1047, %v962
      %1087 = vst.msk [vmem:[#allocation2 + $0x270] sm:$0xff] %vm1047, %v964
      %1088 = vst.msk [vmem:[#allocation2 + $0x280] sm:$0xff] %vm1047, %v966
      %1089 = vst.msk [vmem:[#allocation2 + $0x290] sm:$0xff] %vm1047, %v968
      %1090 = vst.msk [vmem:[#allocation2 + $0x2a0] sm:$0xff] %vm1047, %v970
      %1091 = vst.msk [vmem:[#allocation2 + $0x2b0] sm:$0xff] %vm1047, %v972
      %1092 = vst.msk [vmem:[#allocation2 + $0x2c0] sm:$0xff] %vm1047, %v974
      %1093 = vst.msk [vmem:[#allocation2 + $0x2d0] sm:$0xff] %vm1047, %v976
      %1094 = vst.msk [vmem:[#allocation2 + $0x2e0] sm:$0xff] %vm1047, %v978
      %1095 = vst.msk [vmem:[#allocation2 + $0x2f0] sm:$0xff] %vm1047, %v980
      %1096 = vst.msk [vmem:[#allocation2 + $0x300] sm:$0xff] %vm1047, %v982
      %1097 = vst.msk [vmem:[#allocation2 + $0x310] sm:$0xff] %vm1047, %v984
      %1098 = vst.msk [vmem:[#allocation2 + $0x320] sm:$0xff] %vm1047, %v986
      %1099 = vst.msk [vmem:[#allocation2 + $0x330] sm:$0xff] %vm1047, %v988
      %1100 = vst.msk [vmem:[#allocation2 + $0x340] sm:$0xff] %vm1047, %v990
      %1101 = vst.msk [vmem:[#allocation2 + $0x350] sm:$0xff] %vm1047, %v992
      %1102 = vrot.lane.b32.xlu0 %v773, 64
      %v1103 = vpop.permute.xlu0 %1102
      %1104 = vrot.lane.b32.xlu0 %v774, 64
      %v1105 = vpop.permute.xlu0 %1104
      %1106 = vrot.lane.b32.xlu0 %v775, 64
      %v1107 = vpop.permute.xlu0 %1106
      %1108 = vrot.lane.b32.xlu0 %v776, 64
      %v1109 = vpop.permute.xlu0 %1108
      %1110 = vrot.lane.b32.xlu0 %v777, 64
      %v1111 = vpop.permute.xlu0 %1110
      %1112 = vrot.lane.b32.xlu0 %v778, 64
      %v1113 = vpop.permute.xlu0 %1112
      %1114 = vrot.lane.b32.xlu0 %v779, 64
      %v1115 = vpop.permute.xlu0 %1114
      %1116 = vrot.lane.b32.xlu0 %v780, 64
      %v1117 = vpop.permute.xlu0 %1116
      %1118 = vrot.lane.b32.xlu0 %v781, 64
      %v1119 = vpop.permute.xlu0 %1118
      %1120 = vrot.lane.b32.xlu0 %v782, 64
      %v1121 = vpop.permute.xlu0 %1120
      %1122 = vrot.lane.b32.xlu0 %v783, 64
      %v1123 = vpop.permute.xlu0 %1122
      %1124 = vrot.lane.b32.xlu0 %v784, 64
      %v1125 = vpop.permute.xlu0 %1124
      %1126 = vrot.lane.b32.xlu0 %v785, 64
      %v1127 = vpop.permute.xlu0 %1126
      %1128 = vrot.lane.b32.xlu0 %v786, 64
      %v1129 = vpop.permute.xlu0 %1128
      %1130 = vrot.lane.b32.xlu0 %v787, 64
      %v1131 = vpop.permute.xlu0 %1130
      %1132 = vrot.lane.b32.xlu0 %v788, 64
      %v1133 = vpop.permute.xlu0 %1132
      %1134 = vrot.lane.b32.xlu0 %v789, 64
      %v1135 = vpop.permute.xlu0 %1134
      %1136 = vrot.lane.b32.xlu0 %v790, 64
      %v1137 = vpop.permute.xlu0 %1136
      %1138 = vrot.lane.b32.xlu0 %v791, 64
      %v1139 = vpop.permute.xlu0 %1138
      %1140 = vrot.lane.b32.xlu0 %v792, 64
      %v1141 = vpop.permute.xlu0 %1140
      %1142 = vrot.lane.b32.xlu0 %v793, 64
      %v1143 = vpop.permute.xlu0 %1142
      %1144 = vrot.lane.b32.xlu0 %v794, 64
      %v1145 = vpop.permute.xlu0 %1144
      %1146 = vrot.lane.b32.xlu0 %v795, 64
      %v1147 = vpop.permute.xlu0 %1146
      %1148 = vrot.lane.b32.xlu0 %v796, 64
      %v1149 = vpop.permute.xlu0 %1148
      %1150 = vrot.lane.b32.xlu0 %v797, 64
      %v1151 = vpop.permute.xlu0 %1150
      %1152 = vrot.lane.b32.xlu0 %v798, 64
      %v1153 = vpop.permute.xlu0 %1152
      %1154 = vrot.lane.b32.xlu0 %v799, 64
      %v1155 = vpop.permute.xlu0 %1154
      %1156 = vrot.lane.b32.xlu0 %v800, 64
      %v1157 = vpop.permute.xlu0 %1156
      %1158 = vrot.lane.b32.xlu0 %v801, 64
      %v1159 = vpop.permute.xlu0 %1158
      %1160 = vrot.lane.b32.xlu0 %v802, 64
      %v1161 = vpop.permute.xlu0 %1160
      %1162 = vrot.lane.b32.xlu0 %v803, 64
      %v1163 = vpop.permute.xlu0 %1162
      %1164 = vrot.lane.b32.xlu0 %v804, 64
      %v1165 = vpop.permute.xlu0 %1164
      %1166 = vrot.lane.b32.xlu0 %v805, 64
      %v1167 = vpop.permute.xlu0 %1166
      %1168 = vrot.lane.b32.xlu0 %v806, 64
      %v1169 = vpop.permute.xlu0 %1168
      %1170 = vrot.lane.b32.xlu0 %v807, 64
      %v1171 = vpop.permute.xlu0 %1170
      %1172 = vrot.lane.b32.xlu0 %v808, 64
      %v1173 = vpop.permute.xlu0 %1172
      %1174 = vrot.lane.b32.xlu0 %v809, 64
      %v1175 = vpop.permute.xlu0 %1174
      %1176 = vrot.lane.b32.xlu0 %v810, 64
      %v1177 = vpop.permute.xlu0 %1176
      %1178 = vrot.lane.b32.xlu0 %v811, 64
      %v1179 = vpop.permute.xlu0 %1178
      %1180 = vrot.lane.b32.xlu0 %v812, 64
      %v1181 = vpop.permute.xlu0 %1180
      %1182 = vrot.lane.b32.xlu0 %v813, 64
      %v1183 = vpop.permute.xlu0 %1182
      %1184 = vrot.lane.b32.xlu0 %v814, 64
      %v1185 = vpop.permute.xlu0 %1184
      %1186 = vrot.lane.b32.xlu0 %v815, 64
      %v1187 = vpop.permute.xlu0 %1186
      %1188 = vrot.lane.b32.xlu0 %v816, 64
      %v1189 = vpop.permute.xlu0 %1188
      %1190 = vrot.lane.b32.xlu0 %v817, 64
      %v1191 = vpop.permute.xlu0 %1190
      %1192 = vrot.lane.b32.xlu0 %v818, 64
      %v1193 = vpop.permute.xlu0 %1192
      %1194 = vrot.lane.b32.xlu0 %v819, 64
      %v1195 = vpop.permute.xlu0 %1194
      %1196 = vrot.lane.b32.xlu0 %v820, 64
      %v1197 = vpop.permute.xlu0 %1196
      %1198 = vrot.lane.b32.xlu0 %v821, 64
      %v1199 = vpop.permute.xlu0 %1198
      %1200 = vrot.lane.b32.xlu0 %v822, 64
      %v1201 = vpop.permute.xlu0 %1200
      %1202 = vrot.lane.b32.xlu0 %v823, 64
      %v1203 = vpop.permute.xlu0 %1202
      %1204 = vrot.lane.b32.xlu0 %v824, 64
      %v1205 = vpop.permute.xlu0 %1204
      %1206 = vrot.lane.b32.xlu0 %v825, 64
      %v1207 = vpop.permute.xlu0 %1206
      %1208 = vrot.lane.b32.xlu0 %v826, 64
      %v1209 = vpop.permute.xlu0 %1208
      %vm1264 = vcmask 1048064
      %1265 = vst.msk [vmem:[#allocation2] sm:$0xff] %vm1264, %v1103
      %1266 = vst.msk [vmem:[#allocation2 + $0x10] sm:$0xff] %vm1264, %v1105
      %1267 = vst.msk [vmem:[#allocation2 + $0x20] sm:$0xff] %vm1264, %v1107
      %1268 = vst.msk [vmem:[#allocation2 + $0x30] sm:$0xff] %vm1264, %v1109
      %1269 = vst.msk [vmem:[#allocation2 + $0x40] sm:$0xff] %vm1264, %v1111
      %1270 = vst.msk [vmem:[#allocation2 + $0x50] sm:$0xff] %vm1264, %v1113
      %1271 = vst.msk [vmem:[#allocation2 + $0x60] sm:$0xff] %vm1264, %v1115
      %1272 = vst.msk [vmem:[#allocation2 + $0x70] sm:$0xff] %vm1264, %v1117
      %1273 = vst.msk [vmem:[#allocation2 + $0x80] sm:$0xff] %vm1264, %v1119
      %1274 = vst.msk [vmem:[#allocation2 + $0x90] sm:$0xff] %vm1264, %v1121
      %1275 = vst.msk [vmem:[#allocation2 + $0xa0] sm:$0xff] %vm1264, %v1123
      %1276 = vst.msk [vmem:[#allocation2 + $0xb0] sm:$0xff] %vm1264, %v1125
      %1277 = vst.msk [vmem:[#allocation2 + $0xc0] sm:$0xff] %vm1264, %v1127
      %1278 = vst.msk [vmem:[#allocation2 + $0xd0] sm:$0xff] %vm1264, %v1129
      %1279 = vst.msk [vmem:[#allocation2 + $0xe0] sm:$0xff] %vm1264, %v1131
      %1280 = vst.msk [vmem:[#allocation2 + $0xf0] sm:$0xff] %vm1264, %v1133
      %1281 = vst.msk [vmem:[#allocation2 + $0x100] sm:$0xff] %vm1264, %v1135
      %1282 = vst.msk [vmem:[#allocation2 + $0x110] sm:$0xff] %vm1264, %v1137
      %1283 = vst.msk [vmem:[#allocation2 + $0x120] sm:$0xff] %vm1264, %v1139
      %1284 = vst.msk [vmem:[#allocation2 + $0x130] sm:$0xff] %vm1264, %v1141
      %1285 = vst.msk [vmem:[#allocation2 + $0x140] sm:$0xff] %vm1264, %v1143
      %1286 = vst.msk [vmem:[#allocation2 + $0x150] sm:$0xff] %vm1264, %v1145
      %1287 = vst.msk [vmem:[#allocation2 + $0x160] sm:$0xff] %vm1264, %v1147
      %1288 = vst.msk [vmem:[#allocation2 + $0x170] sm:$0xff] %vm1264, %v1149
      %1289 = vst.msk [vmem:[#allocation2 + $0x180] sm:$0xff] %vm1264, %v1151
      %1290 = vst.msk [vmem:[#allocation2 + $0x190] sm:$0xff] %vm1264, %v1153
      %1291 = vst.msk [vmem:[#allocation2 + $0x1a0] sm:$0xff] %vm1264, %v1155
      %1292 = vst.msk [vmem:[#allocation2 + $0x1b0] sm:$0xff] %vm1264, %v1157
      %1293 = vst.msk [vmem:[#allocation2 + $0x1c0] sm:$0xff] %vm1264, %v1159
      %1294 = vst.msk [vmem:[#allocation2 + $0x1d0] sm:$0xff] %vm1264, %v1161
      %1295 = vst.msk [vmem:[#allocation2 + $0x1e0] sm:$0xff] %vm1264, %v1163
      %1296 = vst.msk [vmem:[#allocation2 + $0x1f0] sm:$0xff] %vm1264, %v1165
      %1297 = vst.msk [vmem:[#allocation2 + $0x200] sm:$0xff] %vm1264, %v1167
      %1298 = vst.msk [vmem:[#allocation2 + $0x210] sm:$0xff] %vm1264, %v1169
      %1299 = vst.msk [vmem:[#allocation2 + $0x220] sm:$0xff] %vm1264, %v1171
      %1300 = vst.msk [vmem:[#allocation2 + $0x230] sm:$0xff] %vm1264, %v1173
      %1301 = vst.msk [vmem:[#allocation2 + $0x240] sm:$0xff] %vm1264, %v1175
      %1302 = vst.msk [vmem:[#allocation2 + $0x250] sm:$0xff] %vm1264, %v1177
      %1303 = vst.msk [vmem:[#allocation2 + $0x260] sm:$0xff] %vm1264, %v1179
      %1304 = vst.msk [vmem:[#allocation2 + $0x270] sm:$0xff] %vm1264, %v1181
      %1305 = vst.msk [vmem:[#allocation2 + $0x280] sm:$0xff] %vm1264, %v1183
      %1306 = vst.msk [vmem:[#allocation2 + $0x290] sm:$0xff] %vm1264, %v1185
      %1307 = vst.msk [vmem:[#allocation2 + $0x2a0] sm:$0xff] %vm1264, %v1187
      %1308 = vst.msk [vmem:[#allocation2 + $0x2b0] sm:$0xff] %vm1264, %v1189
      %1309 = vst.msk [vmem:[#allocation2 + $0x2c0] sm:$0xff] %vm1264, %v1191
      %1310 = vst.msk [vmem:[#allocation2 + $0x2d0] sm:$0xff] %vm1264, %v1193
      %1311 = vst.msk [vmem:[#allocation2 + $0x2e0] sm:$0xff] %vm1264, %v1195
      %1312 = vst.msk [vmem:[#allocation2 + $0x2f0] sm:$0xff] %vm1264, %v1197
      %1313 = vst.msk [vmem:[#allocation2 + $0x300] sm:$0xff] %vm1264, %v1199
      %1314 = vst.msk [vmem:[#allocation2 + $0x310] sm:$0xff] %vm1264, %v1201
      %1315 = vst.msk [vmem:[#allocation2 + $0x320] sm:$0xff] %vm1264, %v1203
      %1316 = vst.msk [vmem:[#allocation2 + $0x330] sm:$0xff] %vm1264, %v1205
      %1317 = vst.msk [vmem:[#allocation2 + $0x340] sm:$0xff] %vm1264, %v1207
      %1318 = vst.msk [vmem:[#allocation2 + $0x350] sm:$0xff] %vm1264, %v1209
      %vm1320 = vcmask 1046528
      %v1321 = vrot.slane %v773, 1
      %v1322 = vrot.slane %v774, 1
      %v1323 = vsel %vm1320, %v1321, %v1322
      %v1324 = vrot.slane %v775, 1
      %v1325 = vsel %vm1320, %v1322, %v1324
      %v1326 = vrot.slane %v776, 1
      %v1327 = vsel %vm1320, %v1324, %v1326
      %v1328 = vrot.slane %v777, 1
      %v1329 = vsel %vm1320, %v1326, %v1328
      %v1330 = vrot.slane %v778, 1
      %v1331 = vsel %vm1320, %v1328, %v1330
      %v1332 = vrot.slane %v779, 1
      %v1333 = vsel %vm1320, %v1330, %v1332
      %v1334 = vrot.slane %v780, 1
      %v1335 = vsel %vm1320, %v1332, %v1334
      %v1336 = vrot.slane %v781, 1
      %v1337 = vsel %vm1320, %v1334, %v1336
      %v1338 = vrot.slane %v782, 1
      %v1339 = vsel %vm1320, %v1336, %v1338
      %v1340 = vrot.slane %v783, 1
      %v1341 = vsel %vm1320, %v1338, %v1340
      %v1342 = vrot.slane %v784, 1
      %v1343 = vsel %vm1320, %v1340, %v1342
      %v1344 = vrot.slane %v785, 1
      %v1345 = vsel %vm1320, %v1342, %v1344
      %v1346 = vrot.slane %v786, 1
      %v1347 = vsel %vm1320, %v1344, %v1346
      %v1348 = vrot.slane %v787, 1
      %v1349 = vsel %vm1320, %v1346, %v1348
      %v1350 = vrot.slane %v788, 1
      %v1351 = vsel %vm1320, %v1348, %v1350
      %v1352 = vrot.slane %v789, 1
      %v1353 = vsel %vm1320, %v1350, %v1352
      %v1354 = vrot.slane %v790, 1
      %v1355 = vsel %vm1320, %v1352, %v1354
      %v1356 = vrot.slane %v791, 1
      %v1357 = vsel %vm1320, %v1354, %v1356
      %v1358 = vrot.slane %v792, 1
      %v1359 = vsel %vm1320, %v1356, %v1358
      %v1360 = vrot.slane %v793, 1
      %v1361 = vsel %vm1320, %v1358, %v1360
      %v1362 = vrot.slane %v794, 1
      %v1363 = vsel %vm1320, %v1360, %v1362
      %v1364 = vrot.slane %v795, 1
      %v1365 = vsel %vm1320, %v1362, %v1364
      %v1366 = vrot.slane %v796, 1
      %v1367 = vsel %vm1320, %v1364, %v1366
      %v1368 = vrot.slane %v797, 1
      %v1369 = vsel %vm1320, %v1366, %v1368
      %v1370 = vrot.slane %v798, 1
      %v1371 = vsel %vm1320, %v1368, %v1370
      %v1372 = vrot.slane %v799, 1
      %v1373 = vsel %vm1320, %v1370, %v1372
      %v1374 = vrot.slane %v800, 1
      %v1375 = vsel %vm1320, %v1372, %v1374
      %v1376 = vrot.slane %v801, 1
      %v1377 = vsel %vm1320, %v1374, %v1376
      %v1378 = vrot.slane %v802, 1
      %v1379 = vsel %vm1320, %v1376, %v1378
      %v1380 = vrot.slane %v803, 1
      %v1381 = vsel %vm1320, %v1378, %v1380
      %v1382 = vrot.slane %v804, 1
      %v1383 = vsel %vm1320, %v1380, %v1382
      %v1384 = vrot.slane %v805, 1
      %v1385 = vsel %vm1320, %v1382, %v1384
      %v1386 = vrot.slane %v806, 1
      %v1387 = vsel %vm1320, %v1384, %v1386
      %v1388 = vrot.slane %v807, 1
      %v1389 = vsel %vm1320, %v1386, %v1388
      %v1390 = vrot.slane %v808, 1
      %v1391 = vsel %vm1320, %v1388, %v1390
      %v1392 = vrot.slane %v809, 1
      %v1393 = vsel %vm1320, %v1390, %v1392
      %v1394 = vrot.slane %v810, 1
      %v1395 = vsel %vm1320, %v1392, %v1394
      %v1396 = vrot.slane %v811, 1
      %v1397 = vsel %vm1320, %v1394, %v1396
      %v1398 = vrot.slane %v812, 1
      %v1399 = vsel %vm1320, %v1396, %v1398
      %v1400 = vrot.slane %v813, 1
      %v1401 = vsel %vm1320, %v1398, %v1400
      %v1402 = vrot.slane %v814, 1
      %v1403 = vsel %vm1320, %v1400, %v1402
      %v1404 = vrot.slane %v815, 1
      %v1405 = vsel %vm1320, %v1402, %v1404
      %v1406 = vrot.slane %v816, 1
      %v1407 = vsel %vm1320, %v1404, %v1406
      %v1408 = vrot.slane %v817, 1
      %v1409 = vsel %vm1320, %v1406, %v1408
      %v1410 = vrot.slane %v818, 1
      %v1411 = vsel %vm1320, %v1408, %v1410
      %v1412 = vrot.slane %v819, 1
      %v1413 = vsel %vm1320, %v1410, %v1412
      %v1414 = vrot.slane %v820, 1
      %v1415 = vsel %vm1320, %v1412, %v1414
      %v1416 = vrot.slane %v821, 1
      %v1417 = vsel %vm1320, %v1414, %v1416
      %v1418 = vrot.slane %v822, 1
      %v1419 = vsel %vm1320, %v1416, %v1418
      %v1420 = vrot.slane %v823, 1
      %v1421 = vsel %vm1320, %v1418, %v1420
      %v1422 = vrot.slane %v824, 1
      %v1423 = vsel %vm1320, %v1420, %v1422
      %v1424 = vrot.slane %v825, 1
      %v1425 = vsel %vm1320, %v1422, %v1424
      %v1426 = vrot.slane %v826, 1
      %v1427 = vsel %vm1320, %v1424, %v1426
      %v1428 = vrot.slane %v827, 1
      %v1429 = vsel %vm1320, %v1426, %v1428
      %1484 = vst.msk [vmem:[#allocation2 + $0x8] sm:$0xff] %vm1047, %v1323
      %1485 = vst.msk [vmem:[#allocation2 + $0x18] sm:$0xff] %vm1047, %v1325
      %1486 = vst.msk [vmem:[#allocation2 + $0x28] sm:$0xff] %vm1047, %v1327
      %1487 = vst.msk [vmem:[#allocation2 + $0x38] sm:$0xff] %vm1047, %v1329
      %1488 = vst.msk [vmem:[#allocation2 + $0x48] sm:$0xff] %vm1047, %v1331
      %1489 = vst.msk [vmem:[#allocation2 + $0x58] sm:$0xff] %vm1047, %v1333
      %1490 = vst.msk [vmem:[#allocation2 + $0x68] sm:$0xff] %vm1047, %v1335
      %1491 = vst.msk [vmem:[#allocation2 + $0x78] sm:$0xff] %vm1047, %v1337
      %1492 = vst.msk [vmem:[#allocation2 + $0x88] sm:$0xff] %vm1047, %v1339
      %1493 = vst.msk [vmem:[#allocation2 + $0x98] sm:$0xff] %vm1047, %v1341
      %1494 = vst.msk [vmem:[#allocation2 + $0xa8] sm:$0xff] %vm1047, %v1343
      %1495 = vst.msk [vmem:[#allocation2 + $0xb8] sm:$0xff] %vm1047, %v1345
      %1496 = vst.msk [vmem:[#allocation2 + $0xc8] sm:$0xff] %vm1047, %v1347
      %1497 = vst.msk [vmem:[#allocation2 + $0xd8] sm:$0xff] %vm1047, %v1349
      %1498 = vst.msk [vmem:[#allocation2 + $0xe8] sm:$0xff] %vm1047, %v1351
      %1499 = vst.msk [vmem:[#allocation2 + $0xf8] sm:$0xff] %vm1047, %v1353
      %1500 = vst.msk [vmem:[#allocation2 + $0x108] sm:$0xff] %vm1047, %v1355
      %1501 = vst.msk [vmem:[#allocation2 + $0x118] sm:$0xff] %vm1047, %v1357
      %1502 = vst.msk [vmem:[#allocation2 + $0x128] sm:$0xff] %vm1047, %v1359
      %1503 = vst.msk [vmem:[#allocation2 + $0x138] sm:$0xff] %vm1047, %v1361
      %1504 = vst.msk [vmem:[#allocation2 + $0x148] sm:$0xff] %vm1047, %v1363
      %1505 = vst.msk [vmem:[#allocation2 + $0x158] sm:$0xff] %vm1047, %v1365
      %1506 = vst.msk [vmem:[#allocation2 + $0x168] sm:$0xff] %vm1047, %v1367
      %1507 = vst.msk [vmem:[#allocation2 + $0x178] sm:$0xff] %vm1047, %v1369
      %1508 = vst.msk [vmem:[#allocation2 + $0x188] sm:$0xff] %vm1047, %v1371
      %1509 = vst.msk [vmem:[#allocation2 + $0x198] sm:$0xff] %vm1047, %v1373
      %1510 = vst.msk [vmem:[#allocation2 + $0x1a8] sm:$0xff] %vm1047, %v1375
      %1511 = vst.msk [vmem:[#allocation2 + $0x1b8] sm:$0xff] %vm1047, %v1377
      %1512 = vst.msk [vmem:[#allocation2 + $0x1c8] sm:$0xff] %vm1047, %v1379
      %1513 = vst.msk [vmem:[#allocation2 + $0x1d8] sm:$0xff] %vm1047, %v1381
      %1514 = vst.msk [vmem:[#allocation2 + $0x1e8] sm:$0xff] %vm1047, %v1383
      %1515 = vst.msk [vmem:[#allocation2 + $0x1f8] sm:$0xff] %vm1047, %v1385
      %1516 = vst.msk [vmem:[#allocation2 + $0x208] sm:$0xff] %vm1047, %v1387
      %1517 = vst.msk [vmem:[#allocation2 + $0x218] sm:$0xff] %vm1047, %v1389
      %1518 = vst.msk [vmem:[#allocation2 + $0x228] sm:$0xff] %vm1047, %v1391
      %1519 = vst.msk [vmem:[#allocation2 + $0x238] sm:$0xff] %vm1047, %v1393
      %1520 = vst.msk [vmem:[#allocation2 + $0x248] sm:$0xff] %vm1047, %v1395
      %1521 = vst.msk [vmem:[#allocation2 + $0x258] sm:$0xff] %vm1047, %v1397
      %1522 = vst.msk [vmem:[#allocation2 + $0x268] sm:$0xff] %vm1047, %v1399
      %1523 = vst.msk [vmem:[#allocation2 + $0x278] sm:$0xff] %vm1047, %v1401
      %1524 = vst.msk [vmem:[#allocation2 + $0x288] sm:$0xff] %vm1047, %v1403
      %1525 = vst.msk [vmem:[#allocation2 + $0x298] sm:$0xff] %vm1047, %v1405
      %1526 = vst.msk [vmem:[#allocation2 + $0x2a8] sm:$0xff] %vm1047, %v1407
      %1527 = vst.msk [vmem:[#allocation2 + $0x2b8] sm:$0xff] %vm1047, %v1409
      %1528 = vst.msk [vmem:[#allocation2 + $0x2c8] sm:$0xff] %vm1047, %v1411
      %1529 = vst.msk [vmem:[#allocation2 + $0x2d8] sm:$0xff] %vm1047, %v1413
      %1530 = vst.msk [vmem:[#allocation2 + $0x2e8] sm:$0xff] %vm1047, %v1415
      %1531 = vst.msk [vmem:[#allocation2 + $0x2f8] sm:$0xff] %vm1047, %v1417
      %1532 = vst.msk [vmem:[#allocation2 + $0x308] sm:$0xff] %vm1047, %v1419
      %1533 = vst.msk [vmem:[#allocation2 + $0x318] sm:$0xff] %vm1047, %v1421
      %1534 = vst.msk [vmem:[#allocation2 + $0x328] sm:$0xff] %vm1047, %v1423
      %1535 = vst.msk [vmem:[#allocation2 + $0x338] sm:$0xff] %vm1047, %v1425
      %1536 = vst.msk [vmem:[#allocation2 + $0x348] sm:$0xff] %vm1047, %v1427
      %1537 = vst.msk [vmem:[#allocation2 + $0x358] sm:$0xff] %vm1047, %v1429
      %v1538 = vld [vmem:[#allocation2] sm:$0xff]
      %v1539 = vld [vmem:[#allocation2 + $0x8] sm:$0xff]
      %v1540 = vld [vmem:[#allocation2 + $0x10] sm:$0xff]
      %v1541 = vld [vmem:[#allocation2 + $0x18] sm:$0xff]
      %v1542 = vld [vmem:[#allocation2 + $0x20] sm:$0xff]
      %v1543 = vld [vmem:[#allocation2 + $0x28] sm:$0xff]
      %v1544 = vld [vmem:[#allocation2 + $0x30] sm:$0xff]
      %v1545 = vld [vmem:[#allocation2 + $0x38] sm:$0xff]
      %v1546 = vld [vmem:[#allocation2 + $0x40] sm:$0xff]
      %v1547 = vld [vmem:[#allocation2 + $0x48] sm:$0xff]
      %v1548 = vld [vmem:[#allocation2 + $0x50] sm:$0xff]
      %v1549 = vld [vmem:[#allocation2 + $0x58] sm:$0xff]
      %v1550 = vld [vmem:[#allocation2 + $0x60] sm:$0xff]
      %v1551 = vld [vmem:[#allocation2 + $0x68] sm:$0xff]
      %v1552 = vld [vmem:[#allocation2 + $0x70] sm:$0xff]
      %v1553 = vld [vmem:[#allocation2 + $0x78] sm:$0xff]
      %v1554 = vld [vmem:[#allocation2 + $0x80] sm:$0xff]
      %v1555 = vld [vmem:[#allocation2 + $0x88] sm:$0xff]
      %v1556 = vld [vmem:[#allocation2 + $0x90] sm:$0xff]
      %v1557 = vld [vmem:[#allocation2 + $0x98] sm:$0xff]
      %v1558 = vld [vmem:[#allocation2 + $0xa0] sm:$0xff]
      %v1559 = vld [vmem:[#allocation2 + $0xa8] sm:$0xff]
      %v1560 = vld [vmem:[#allocation2 + $0xb0] sm:$0xff]
      %v1561 = vld [vmem:[#allocation2 + $0xb8] sm:$0xff]
      %v1562 = vld [vmem:[#allocation2 + $0xc0] sm:$0xff]
      %v1563 = vld [vmem:[#allocation2 + $0xc8] sm:$0xff]
      %v1564 = vld [vmem:[#allocation2 + $0xd0] sm:$0xff]
      %v1565 = vld [vmem:[#allocation2 + $0xd8] sm:$0xff]
      %v1566 = vld [vmem:[#allocation2 + $0xe0] sm:$0xff]
      %v1567 = vld [vmem:[#allocation2 + $0xe8] sm:$0xff]
      %v1568 = vld [vmem:[#allocation2 + $0xf0] sm:$0xff]
      %v1569 = vld [vmem:[#allocation2 + $0xf8] sm:$0xff]
      %v1570 = vld [vmem:[#allocation2 + $0x100] sm:$0xff]
      %v1571 = vld [vmem:[#allocation2 + $0x108] sm:$0xff]
      %v1572 = vld [vmem:[#allocation2 + $0x110] sm:$0xff]
      %v1573 = vld [vmem:[#allocation2 + $0x118] sm:$0xff]
      %v1574 = vld [vmem:[#allocation2 + $0x120] sm:$0xff]
      %v1575 = vld [vmem:[#allocation2 + $0x128] sm:$0xff]
      %v1576 = vld [vmem:[#allocation2 + $0x130] sm:$0xff]
      %v1577 = vld [vmem:[#allocation2 + $0x138] sm:$0xff]
      %v1578 = vld [vmem:[#allocation2 + $0x140] sm:$0xff]
      %v1579 = vld [vmem:[#allocation2 + $0x148] sm:$0xff]
      %v1580 = vld [vmem:[#allocation2 + $0x150] sm:$0xff]
      %v1581 = vld [vmem:[#allocation2 + $0x158] sm:$0xff]
      %v1582 = vld [vmem:[#allocation2 + $0x160] sm:$0xff]
      %v1583 = vld [vmem:[#allocation2 + $0x168] sm:$0xff]
      %v1584 = vld [vmem:[#allocation2 + $0x170] sm:$0xff]
      %v1585 = vld [vmem:[#allocation2 + $0x178] sm:$0xff]
      %v1586 = vld [vmem:[#allocation2 + $0x180] sm:$0xff]
      %v1587 = vld [vmem:[#allocation2 + $0x188] sm:$0xff]
      %v1588 = vld [vmem:[#allocation2 + $0x190] sm:$0xff]
      %v1589 = vld [vmem:[#allocation2 + $0x198] sm:$0xff]
      %v1590 = vld [vmem:[#allocation2 + $0x1a0] sm:$0xff]
      %v1591 = vld [vmem:[#allocation2 + $0x1a8] sm:$0xff]
      %v1592 = vld [vmem:[#allocation2 + $0x1b0] sm:$0xff]
      %v1593 = vld [vmem:[#allocation2 + $0x1b8] sm:$0xff]
      %v1594 = vld [vmem:[#allocation2 + $0x1c0] sm:$0xff]
      %v1595 = vld [vmem:[#allocation2 + $0x1c8] sm:$0xff]
      %v1596 = vld [vmem:[#allocation2 + $0x1d0] sm:$0xff]
      %v1597 = vld [vmem:[#allocation2 + $0x1d8] sm:$0xff]
      %v1598 = vld [vmem:[#allocation2 + $0x1e0] sm:$0xff]
      %v1599 = vld [vmem:[#allocation2 + $0x1e8] sm:$0xff]
      %v1600 = vld [vmem:[#allocation2 + $0x1f0] sm:$0xff]
      %v1601 = vld [vmem:[#allocation2 + $0x1f8] sm:$0xff]
      %v1602 = vld [vmem:[#allocation2 + $0x200] sm:$0xff]
      %v1603 = vld [vmem:[#allocation2 + $0x208] sm:$0xff]
      %v1604 = vld [vmem:[#allocation2 + $0x210] sm:$0xff]
      %v1605 = vld [vmem:[#allocation2 + $0x218] sm:$0xff]
      %v1606 = vld [vmem:[#allocation2 + $0x220] sm:$0xff]
      %v1607 = vld [vmem:[#allocation2 + $0x228] sm:$0xff]
      %v1608 = vld [vmem:[#allocation2 + $0x230] sm:$0xff]
      %v1609 = vld [vmem:[#allocation2 + $0x238] sm:$0xff]
      %v1610 = vld [vmem:[#allocation2 + $0x240] sm:$0xff]
      %v1611 = vld [vmem:[#allocation2 + $0x248] sm:$0xff]
      %v1612 = vld [vmem:[#allocation2 + $0x250] sm:$0xff]
      %v1613 = vld [vmem:[#allocation2 + $0x258] sm:$0xff]
      %v1614 = vld [vmem:[#allocation2 + $0x260] sm:$0xff]
      %v1615 = vld [vmem:[#allocation2 + $0x268] sm:$0xff]
      %v1616 = vld [vmem:[#allocation2 + $0x270] sm:$0xff]
      %v1617 = vld [vmem:[#allocation2 + $0x278] sm:$0xff]
      %v1618 = vld [vmem:[#allocation2 + $0x280] sm:$0xff]
      %v1619 = vld [vmem:[#allocation2 + $0x288] sm:$0xff]
      %v1620 = vld [vmem:[#allocation2 + $0x290] sm:$0xff]
      %v1621 = vld [vmem:[#allocation2 + $0x298] sm:$0xff]
      %v1622 = vld [vmem:[#allocation2 + $0x2a0] sm:$0xff]
      %v1623 = vld [vmem:[#allocation2 + $0x2a8] sm:$0xff]
      %v1624 = vld [vmem:[#allocation2 + $0x2b0] sm:$0xff]
      %v1625 = vld [vmem:[#allocation2 + $0x2b8] sm:$0xff]
      %v1626 = vld [vmem:[#allocation2 + $0x2c0] sm:$0xff]
      %v1627 = vld [vmem:[#allocation2 + $0x2c8] sm:$0xff]
      %v1628 = vld [vmem:[#allocation2 + $0x2d0] sm:$0xff]
      %v1629 = vld [vmem:[#allocation2 + $0x2d8] sm:$0xff]
      %v1630 = vld [vmem:[#allocation2 + $0x2e0] sm:$0xff]
      %v1631 = vld [vmem:[#allocation2 + $0x2e8] sm:$0xff]
      %v1632 = vld [vmem:[#allocation2 + $0x2f0] sm:$0xff]
      %v1633 = vld [vmem:[#allocation2 + $0x2f8] sm:$0xff]
      %v1634 = vld [vmem:[%s2] sm:$0xff]
      %v1635 = vld [vmem:[%s2 + $0x8] sm:$0xff]
      %v1636 = vld [vmem:[%s2 + $0x10] sm:$0xff]
      %v1637 = vld [vmem:[%s2 + $0x18] sm:$0xff]
      %v1638 = vld [vmem:[%s2 + $0x20] sm:$0xff]
      %v1639 = vld [vmem:[%s2 + $0x28] sm:$0xff]
      %v1640 = vld [vmem:[%s2 + $0x30] sm:$0xff]
      %v1641 = vld [vmem:[%s2 + $0x38] sm:$0xff]
      %v1642 = vld [vmem:[%s2 + $0x40] sm:$0xff]
      %v1643 = vld [vmem:[%s2 + $0x48] sm:$0xff]
      %v1644 = vld [vmem:[%s2 + $0x50] sm:$0xff]
      %v1645 = vld [vmem:[%s2 + $0x58] sm:$0xff]
      %v1646 = vld [vmem:[%s2 + $0x60] sm:$0xff]
      %v1647 = vld [vmem:[%s2 + $0x68] sm:$0xff]
      %v1648 = vld [vmem:[%s2 + $0x70] sm:$0xff]
      %v1649 = vld [vmem:[%s2 + $0x78] sm:$0xff]
      %v1650 = vld [vmem:[#allocation2 + $0x300] sm:$0xff]
      %v1651 = vld [vmem:[#allocation2 + $0x308] sm:$0xff]
      %v1652 = vld [vmem:[#allocation2 + $0x310] sm:$0xff]
      %v1653 = vld [vmem:[#allocation2 + $0x318] sm:$0xff]
      %v1654 = vld [vmem:[#allocation2 + $0x320] sm:$0xff]
      %v1655 = vld [vmem:[#allocation2 + $0x328] sm:$0xff]
      %s1656 = scalar_lea.vmem %s2, 128
      %v1657 = vld [vmem:[%s1656] sm:$0xff]
      %v1658 = vld [vmem:[%s1656 + $0x8] sm:$0xff]
      %v1659 = vld [vmem:[%s1656 + $0x10] sm:$0xff]
      %v1660 = vld [vmem:[%s1656 + $0x18] sm:$0xff]
      %v1661 = vld [vmem:[%s1656 + $0x20] sm:$0xff]
      %v1662 = vld [vmem:[%s1656 + $0x28] sm:$0xff]
      %v1663 = vld [vmem:[%s1656 + $0x30] sm:$0xff]
      %v1664 = vld [vmem:[%s1656 + $0x38] sm:$0xff]
      %v1665 = vld [vmem:[%s1656 + $0x40] sm:$0xff]
      %v1666 = vld [vmem:[%s1656 + $0x48] sm:$0xff]
      %v1667 = vld [vmem:[%s1656 + $0x50] sm:$0xff]
      %v1668 = vld [vmem:[%s1656 + $0x58] sm:$0xff]
      %v1669 = vld [vmem:[%s1656 + $0x60] sm:$0xff]
      %v1670 = vld [vmem:[%s1656 + $0x68] sm:$0xff]
      %v1671 = vld [vmem:[%s1656 + $0x70] sm:$0xff]
      %v1672 = vld [vmem:[%s1656 + $0x78] sm:$0xff]
      %v1674 = vsel %vm1047, %v1658, 0
      %v1677 = vsel %vm1047, %v1660, 0
      %v1680 = vsel %vm1047, %v1662, 0
      %v1683 = vsel %vm1047, %v1664, 0
      %v1686 = vsel %vm1047, %v1666, 0
      %v1689 = vsel %vm1047, %v1668, 0
      %v1692 = vsel %vm1047, %v1670, 0
      %v1695 = vsel %vm1047, %v1672, 0
      %v1698 = vsel %vm1047, %v1545, 0
      %v1701 = vsel %vm1047, %v1547, 0
      %v1704 = vsel %vm1047, %v1549, 0
      %v1707 = vsel %vm1047, %v1551, 0
      %v1710 = vsel %vm1047, %v1553, 0
      %v1713 = vsel %vm1047, %v1555, 0
      %v1716 = vsel %vm1047, %v1557, 0
      %v1719 = vsel %vm1047, %v1559, 0
      %v1722 = vsel %vm1047, %v1561, 0
      %v1725 = vsel %vm1047, %v1563, 0
      %v1728 = vsel %vm1047, %v1565, 0
      %v1731 = vsel %vm1047, %v1567, 0
      %v1734 = vsel %vm1047, %v1569, 0
      %v1737 = vsel %vm1047, %v1571, 0
      %v1740 = vsel %vm1047, %v1573, 0
      %v1743 = vsel %vm1047, %v1575, 0
      %v1746 = vsel %vm1047, %v1577, 0
      %v1749 = vsel %vm1047, %v1579, 0
      %v1752 = vsel %vm1047, %v1581, 0
      %v1755 = vsel %vm1047, %v1583, 0
      %v1758 = vsel %vm1047, %v1585, 0
      %v1761 = vsel %vm1047, %v1587, 0
      %v1764 = vsel %vm1047, %v1589, 0
      %v1767 = vsel %vm1047, %v1591, 0
      %v1770 = vsel %vm1047, %v1593, 0
      %v1773 = vsel %vm1047, %v1595, 0
      %v1776 = vsel %vm1047, %v1597, 0
      %v1779 = vsel %vm1047, %v1599, 0
      %v1782 = vsel %vm1047, %v1601, 0
      %v1785 = vsel %vm1047, %v1603, 0
      %v1788 = vsel %vm1047, %v1605, 0
      %v1791 = vsel %vm1047, %v1607, 0
      %v1794 = vsel %vm1047, %v1609, 0
      %v1797 = vsel %vm1047, %v1611, 0
      %v1800 = vsel %vm1047, %v1613, 0
      %v1803 = vsel %vm1047, %v1615, 0
      %v1806 = vsel %vm1047, %v1617, 0
      %v1809 = vsel %vm1047, %v1619, 0
      %v1812 = vsel %vm1047, %v1621, 0
      %v1815 = vsel %vm1047, %v1623, 0
      %v1818 = vsel %vm1047, %v1625, 0
      %v1821 = vsel %vm1047, %v1627, 0
      %v1824 = vsel %vm1047, %v1629, 0
      %v1827 = vsel %vm1047, %v1631, 0
      %v1830 = vsel %vm1047, %v1633, 0
      %v1833 = vsel %vm1047, %v1651, 0
      %v1836 = vsel %vm1047, %v1653, 0
      %v1839 = vsel %vm1047, %v1655, 0
      %1841 = vmatprep.subr.mxu0 %v1743
      %1842 = vmatpush1.xpose.msra.mxu0 %v1574
      %1843 = vmatprep.subr.mxu0 %v1740
      %1844 = vmatpush1.xpose.msra.mxu0 %v1572
      %1845 = vmatprep.subr.mxu0 %v1737
      %1846 = vmatpush1.xpose.msra.mxu0 %v1570
      %1847 = vmatprep.subr.mxu0 %v1734
      %1848 = vmatpush1.xpose.msra.mxu0 %v1568
      %1849 = vmatprep.subr.mxu0 %v1731
      %1850 = vmatpush1.xpose.msra.mxu0 %v1566
      %1851 = vmatprep.subr.mxu0 %v1728
      %1852 = vmatpush1.xpose.msra.mxu0 %v1564
      %1853 = vmatprep.subr.mxu0 %v1725
      %1854 = vmatpush1.xpose.msra.mxu0 %v1562
      %1855 = vmatprep.subr.mxu0 %v1722
      %1856 = vmatpush1.xpose.msra.mxu0 %v1560
      %1857 = vmatprep.subr.mxu0 %v1719
      %1858 = vmatpush1.xpose.msra.mxu0 %v1558
      %1859 = vmatprep.subr.mxu0 %v1716
      %1860 = vmatpush1.xpose.msra.mxu0 %v1556
      %1861 = vmatprep.subr.mxu0 %v1713
      %1862 = vmatpush1.xpose.msra.mxu0 %v1554
      %1863 = vmatprep.subr.mxu0 %v1710
      %1864 = vmatpush1.xpose.msra.mxu0 %v1552
      %1865 = vmatprep.subr.mxu0 %v1707
      %1866 = vmatpush1.xpose.msra.mxu0 %v1550
      %1867 = vmatprep.subr.mxu0 %v1704
      %1868 = vmatpush1.xpose.msra.mxu0 %v1548
      %1869 = vmatprep.subr.mxu0 %v1701
      %1870 = vmatpush1.xpose.msra.mxu0 %v1546
      %1871 = vmatprep.subr.mxu0 %v1698
      %1872 = vmatpush1.xpose.msra.mxu0 %v1544
      %1873 = vmatprep.subr.mxu0 %v1791
      %1874 = vmatpush2.xpose.msra.mxu0 %v1606
      %1875 = vmatprep.subr.mxu0 %v1788
      %1876 = vmatpush2.xpose.msra.mxu0 %v1604
      %1877 = vmatprep.subr.mxu0 %v1785
      %1878 = vmatpush2.xpose.msra.mxu0 %v1602
      %1879 = vmatprep.subr.mxu0 %v1782
      %1880 = vmatpush2.xpose.msra.mxu0 %v1600
      %1881 = vmatprep.subr.mxu0 %v1779
      %1882 = vmatpush2.xpose.msra.mxu0 %v1598
      %1883 = vmatprep.subr.mxu0 %v1776
      %1884 = vmatpush2.xpose.msra.mxu0 %v1596
      %1885 = vmatprep.subr.mxu0 %v1773
      %1886 = vmatpush2.xpose.msra.mxu0 %v1594
      %1887 = vmatprep.subr.mxu0 %v1770
      %1888 = vmatpush2.xpose.msra.mxu0 %v1592
      %1889 = vmatprep.subr.mxu0 %v1767
      %1890 = vmatpush2.xpose.msra.mxu0 %v1590
      %1891 = vmatprep.subr.mxu0 %v1764
      %1892 = vmatpush2.xpose.msra.mxu0 %v1588
      %1893 = vmatprep.subr.mxu0 %v1761
      %1894 = vmatpush2.xpose.msra.mxu0 %v1586
      %1895 = vmatprep.subr.mxu0 %v1758
      %1896 = vmatpush2.xpose.msra.mxu0 %v1584
      %1897 = vmatprep.subr.mxu0 %v1755
      %1898 = vmatpush2.xpose.msra.mxu0 %v1582
      %1899 = vmatprep.subr.mxu0 %v1752
      %1900 = vmatpush2.xpose.msra.mxu0 %v1580
      %1901 = vmatprep.subr.mxu0 %v1749
      %1902 = vmatpush2.xpose.msra.mxu0 %v1578
      %1903 = vmatprep.subr.mxu0 %v1746
      %1904 = vmatpush2.xpose.msra.mxu0 %v1576
      %1905 = vmatprep.mubr.f32.mxu0 %v1674
      %1906 = vmatmul.mubr.f32.gmra.mxu0 %v1657
      %v1907 = vpop.f32.mrf.mxu0
      %v1908 = vadd.f32 0.0, %v1907
      %v1909 = vpop.f32.mrf.mxu0
      %v1910 = vadd.f32 0.0, %v1909
      %1911 = vmatprep.mubr.f32.mxu0 %v1677
      %1912 = vmatmul.mubr.f32.gmra.mxu0 %v1659
      %v1913 = vpop.f32.mrf.mxu0
      %v1914 = vadd.f32 0.0, %v1913
      %v1915 = vpop.f32.mrf.mxu0
      %v1916 = vadd.f32 0.0, %v1915
      %1917 = vmatprep.mubr.f32.mxu0 %v1680
      %1918 = vmatmul.mubr.f32.gmra.mxu0 %v1661
      %v1919 = vpop.f32.mrf.mxu0
      %v1920 = vadd.f32 0.0, %v1919
      %v1921 = vpop.f32.mrf.mxu0
      %v1922 = vadd.f32 0.0, %v1921
      %1923 = vmatprep.mubr.f32.mxu0 %v1683
      %1924 = vmatmul.mubr.f32.gmra.mxu0 %v1663
      %v1925 = vpop.f32.mrf.mxu0
      %v1926 = vadd.f32 0.0, %v1925
      %v1927 = vpop.f32.mrf.mxu0
      %v1928 = vadd.f32 0.0, %v1927
      %1929 = vmatprep.mubr.f32.mxu0 %v1686
      %1930 = vmatmul.mubr.f32.gmra.mxu0 %v1665
      %v1931 = vpop.f32.mrf.mxu0
      %v1932 = vadd.f32 0.0, %v1931
      %v1933 = vpop.f32.mrf.mxu0
      %v1934 = vadd.f32 0.0, %v1933
      %1935 = vmatprep.mubr.f32.mxu0 %v1689
      %1936 = vmatmul.mubr.f32.gmra.mxu0 %v1667
      %v1937 = vpop.f32.mrf.mxu0
      %v1938 = vadd.f32 0.0, %v1937
      %v1939 = vpop.f32.mrf.mxu0
      %v1940 = vadd.f32 0.0, %v1939
      %1941 = vmatprep.mubr.f32.mxu0 %v1692
      %1942 = vmatmul.mubr.f32.gmra.mxu0 %v1669
      %v1943 = vpop.f32.mrf.mxu0
      %v1944 = vadd.f32 0.0, %v1943
      %v1945 = vpop.f32.mrf.mxu0
      %v1946 = vadd.f32 0.0, %v1945
      %1947 = vmatprep.mubr.f32.mxu0 %v1695
      %1948 = vmatmul.mubr.f32.gmra.mxu0 %v1671
      %v1949 = vpop.f32.mrf.mxu0
      %v1950 = vadd.f32 0.0, %v1949
      %v1951 = vpop.f32.mrf.mxu0
      %v1952 = vadd.f32 0.0, %v1951
      %1953 = vdwg.mxu0
      %1954 = vmatprep.subr.mxu0 %v1839
      %1955 = vmatpush1.xpose.msra.mxu0 %v1654
      %1956 = vmatprep.subr.mxu0 %v1836
      %1957 = vmatpush1.xpose.msra.mxu0 %v1652
      %1958 = vmatprep.subr.mxu0 %v1833
      %1959 = vmatpush1.xpose.msra.mxu0 %v1650
      %1960 = vmatprep.subr.mxu0 %v1830
      %1961 = vmatpush1.xpose.msra.mxu0 %v1632
      %1962 = vmatprep.subr.mxu0 %v1827
      %1963 = vmatpush1.xpose.msra.mxu0 %v1630
      %1964 = vmatprep.subr.mxu0 %v1824
      %1965 = vmatpush1.xpose.msra.mxu0 %v1628
      %1966 = vmatprep.subr.mxu0 %v1821
      %1967 = vmatpush1.xpose.msra.mxu0 %v1626
      %1968 = vmatprep.subr.mxu0 %v1818
      %1969 = vmatpush1.xpose.msra.mxu0 %v1624
      %1970 = vmatprep.subr.mxu0 %v1815
      %1971 = vmatpush1.xpose.msra.mxu0 %v1622
      %1972 = vmatprep.subr.mxu0 %v1812
      %1973 = vmatpush1.xpose.msra.mxu0 %v1620
      %1974 = vmatprep.subr.mxu0 %v1809
      %1975 = vmatpush1.xpose.msra.mxu0 %v1618
      %1976 = vmatprep.subr.mxu0 %v1806
      %1977 = vmatpush1.xpose.msra.mxu0 %v1616
      %1978 = vmatprep.subr.mxu0 %v1803
      %1979 = vmatpush1.xpose.msra.mxu0 %v1614
      %1980 = vmatprep.subr.mxu0 %v1800
      %1981 = vmatpush1.xpose.msra.mxu0 %v1612
      %1982 = vmatprep.subr.mxu0 %v1797
      %1983 = vmatpush1.xpose.msra.mxu0 %v1610
      %1984 = vmatprep.subr.mxu0 %v1794
      %1985 = vmatpush1.xpose.msra.mxu0 %v1608
      %1986 = vmatprep.subr.mxu0 0.0
      %1987 = vmatpush2.xpose.msra.mxu0 0.0
      %1988 = vmatprep.subr.mxu0 0.0
      %1989 = vmatpush2.xpose.msra.mxu0 0.0
      %1990 = vmatprep.subr.mxu0 0.0
      %1991 = vmatpush2.xpose.msra.mxu0 0.0
      %1992 = vmatprep.subr.mxu0 0.0
      %1993 = vmatpush2.xpose.msra.mxu0 0.0
      %1994 = vmatprep.subr.mxu0 0.0
      %1995 = vmatpush2.xpose.msra.mxu0 0.0
      %1996 = vmatprep.subr.mxu0 0.0
      %1997 = vmatpush2.xpose.msra.mxu0 0.0
      %1998 = vmatprep.subr.mxu0 0.0
      %1999 = vmatpush2.xpose.msra.mxu0 0.0
      %2000 = vmatprep.subr.mxu0 0.0
      %2001 = vmatpush2.xpose.msra.mxu0 0.0
      %2002 = vmatprep.subr.mxu0 0.0
      %2003 = vmatpush2.xpose.msra.mxu0 0.0
      %2004 = vmatprep.subr.mxu0 0.0
      %2005 = vmatpush2.xpose.msra.mxu0 0.0
      %2006 = vmatprep.subr.mxu0 0.0
      %2007 = vmatpush2.xpose.msra.mxu0 0.0
      %2008 = vmatprep.subr.mxu0 0.0
      %2009 = vmatpush2.xpose.msra.mxu0 0.0
      %2010 = vmatprep.subr.mxu0 0.0
      %2011 = vmatpush2.xpose.msra.mxu0 0.0
      %2012 = vmatprep.subr.mxu0 0.0
      %2013 = vmatpush2.xpose.msra.mxu0 0.0
      %2014 = vmatprep.subr.mxu0 0.0
      %2015 = vmatpush2.xpose.msra.mxu0 0.0
      %2016 = vmatprep.subr.mxu0 0.0
      %2017 = vmatpush2.xpose.msra.mxu0 0.0
      %2018 = vmatprep.mubr.f32.mxu0 %v1674
      %2019 = vmatmul.mubr.f32.gmra.mxu0 %v1657
      %v2020 = vpop.f32.mrf.mxu0
      %v2021 = vadd.f32 0.0, %v2020
      %v2022 = vpop.f32.mrf.mxu0
      %2023 = vmatprep.mubr.f32.mxu0 %v1677
      %2024 = vmatmul.mubr.f32.gmra.mxu0 %v1659
      %v2025 = vpop.f32.mrf.mxu0
      %v2026 = vadd.f32 0.0, %v2025
      %v2027 = vpop.f32.mrf.mxu0
      %2028 = vmatprep.mubr.f32.mxu0 %v1680
      %2029 = vmatmul.mubr.f32.gmra.mxu0 %v1661
      %v2030 = vpop.f32.mrf.mxu0
      %v2031 = vadd.f32 0.0, %v2030
      %v2032 = vpop.f32.mrf.mxu0
      %2033 = vmatprep.mubr.f32.mxu0 %v1683
      %2034 = vmatmul.mubr.f32.gmra.mxu0 %v1663
      %v2035 = vpop.f32.mrf.mxu0
      %v2036 = vadd.f32 0.0, %v2035
      %v2037 = vpop.f32.mrf.mxu0
      %2038 = vmatprep.mubr.f32.mxu0 %v1686
      %2039 = vmatmul.mubr.f32.gmra.mxu0 %v1665
      %v2040 = vpop.f32.mrf.mxu0
      %v2041 = vadd.f32 0.0, %v2040
      %v2042 = vpop.f32.mrf.mxu0
      %2043 = vmatprep.mubr.f32.mxu0 %v1689
      %2044 = vmatmul.mubr.f32.gmra.mxu0 %v1667
      %v2045 = vpop.f32.mrf.mxu0
      %v2046 = vadd.f32 0.0, %v2045
      %v2047 = vpop.f32.mrf.mxu0
      %2048 = vmatprep.mubr.f32.mxu0 %v1692
      %2049 = vmatmul.mubr.f32.gmra.mxu0 %v1669
      %v2050 = vpop.f32.mrf.mxu0
      %v2051 = vadd.f32 0.0, %v2050
      %v2052 = vpop.f32.mrf.mxu0
      %2053 = vmatprep.mubr.f32.mxu0 %v1695
      %2054 = vmatmul.mubr.f32.gmra.mxu0 %v1671
      %v2055 = vpop.f32.mrf.mxu0
      %v2056 = vadd.f32 0.0, %v2055
      %v2057 = vpop.f32.mrf.mxu0
      %2058 = vdwg.mxu0
      %v2060 = vsel %vm1047, %v1635, 0
      %v2063 = vsel %vm1047, %v1637, 0
      %v2066 = vsel %vm1047, %v1639, 0
      %v2069 = vsel %vm1047, %v1641, 0
      %v2072 = vsel %vm1047, %v1643, 0
      %v2075 = vsel %vm1047, %v1645, 0
      %v2078 = vsel %vm1047, %v1647, 0
      %v2081 = vsel %vm1047, %v1649, 0
      %v2084 = vsel %vm1047, %v1539, 0
      %v2087 = vsel %vm1047, %v1541, 0
      %v2090 = vsel %vm1047, %v1543, 0
      %2092 = vmatprep.subr.mxu0 %v1734
      %2093 = vmatpush1.xpose.msra.mxu0 %v1568
      %2094 = vmatprep.subr.mxu0 %v1731
      %2095 = vmatpush1.xpose.msra.mxu0 %v1566
      %2096 = vmatprep.subr.mxu0 %v1728
      %2097 = vmatpush1.xpose.msra.mxu0 %v1564
      %2098 = vmatprep.subr.mxu0 %v1725
      %2099 = vmatpush1.xpose.msra.mxu0 %v1562
      %2100 = vmatprep.subr.mxu0 %v1722
      %2101 = vmatpush1.xpose.msra.mxu0 %v1560
      %2102 = vmatprep.subr.mxu0 %v1719
      %2103 = vmatpush1.xpose.msra.mxu0 %v1558
      %2104 = vmatprep.subr.mxu0 %v1716
      %2105 = vmatpush1.xpose.msra.mxu0 %v1556
      %2106 = vmatprep.subr.mxu0 %v1713
      %2107 = vmatpush1.xpose.msra.mxu0 %v1554
      %2108 = vmatprep.subr.mxu0 %v1710
      %2109 = vmatpush1.xpose.msra.mxu0 %v1552
      %2110 = vmatprep.subr.mxu0 %v1707
      %2111 = vmatpush1.xpose.msra.mxu0 %v1550
      %2112 = vmatprep.subr.mxu0 %v1704
      %2113 = vmatpush1.xpose.msra.mxu0 %v1548
      %2114 = vmatprep.subr.mxu0 %v1701
      %2115 = vmatpush1.xpose.msra.mxu0 %v1546
      %2116 = vmatprep.subr.mxu0 %v1698
      %2117 = vmatpush1.xpose.msra.mxu0 %v1544
      %2118 = vmatprep.subr.mxu0 %v2090
      %2119 = vmatpush1.xpose.msra.mxu0 %v1542
      %2120 = vmatprep.subr.mxu0 %v2087
      %2121 = vmatpush1.xpose.msra.mxu0 %v1540
      %2122 = vmatprep.subr.mxu0 %v2084
      %2123 = vmatpush1.xpose.msra.mxu0 %v1538
      %2124 = vmatprep.subr.mxu0 %v1782
      %2125 = vmatpush2.xpose.msra.mxu0 %v1600
      %2126 = vmatprep.subr.mxu0 %v1779
      %2127 = vmatpush2.xpose.msra.mxu0 %v1598
      %2128 = vmatprep.subr.mxu0 %v1776
      %2129 = vmatpush2.xpose.msra.mxu0 %v1596
      %2130 = vmatprep.subr.mxu0 %v1773
      %2131 = vmatpush2.xpose.msra.mxu0 %v1594
      %2132 = vmatprep.subr.mxu0 %v1770
      %2133 = vmatpush2.xpose.msra.mxu0 %v1592
      %2134 = vmatprep.subr.mxu0 %v1767
      %2135 = vmatpush2.xpose.msra.mxu0 %v1590
      %2136 = vmatprep.subr.mxu0 %v1764
      %2137 = vmatpush2.xpose.msra.mxu0 %v1588
      %2138 = vmatprep.subr.mxu0 %v1761
      %2139 = vmatpush2.xpose.msra.mxu0 %v1586
      %2140 = vmatprep.subr.mxu0 %v1758
      %2141 = vmatpush2.xpose.msra.mxu0 %v1584
      %2142 = vmatprep.subr.mxu0 %v1755
      %2143 = vmatpush2.xpose.msra.mxu0 %v1582
      %2144 = vmatprep.subr.mxu0 %v1752
      %2145 = vmatpush2.xpose.msra.mxu0 %v1580
      %2146 = vmatprep.subr.mxu0 %v1749
      %2147 = vmatpush2.xpose.msra.mxu0 %v1578
      %2148 = vmatprep.subr.mxu0 %v1746
      %2149 = vmatpush2.xpose.msra.mxu0 %v1576
      %2150 = vmatprep.subr.mxu0 %v1743
      %2151 = vmatpush2.xpose.msra.mxu0 %v1574
      %2152 = vmatprep.subr.mxu0 %v1740
      %2153 = vmatpush2.xpose.msra.mxu0 %v1572
      %2154 = vmatprep.subr.mxu0 %v1737
      %2155 = vmatpush2.xpose.msra.mxu0 %v1570
      %2156 = vmatprep.mubr.f32.mxu0 %v2060
      %2157 = vmatmul.mubr.f32.gmra.mxu0 %v1634
      %v2158 = vpop.f32.mrf.mxu0
      %v2159 = vadd.f32 %v1908, %v2158
      %v2160 = vpop.f32.mrf.mxu0
      %v2161 = vadd.f32 %v1910, %v2160
      %2162 = vmatprep.mubr.f32.mxu0 %v2063
      %2163 = vmatmul.mubr.f32.gmra.mxu0 %v1636
      %v2164 = vpop.f32.mrf.mxu0
      %v2165 = vadd.f32 %v1914, %v2164
      %v2166 = vpop.f32.mrf.mxu0
      %v2167 = vadd.f32 %v1916, %v2166
      %2168 = vmatprep.mubr.f32.mxu0 %v2066
      %2169 = vmatmul.mubr.f32.gmra.mxu0 %v1638
      %v2170 = vpop.f32.mrf.mxu0
      %v2171 = vadd.f32 %v1920, %v2170
      %v2172 = vpop.f32.mrf.mxu0
      %v2173 = vadd.f32 %v1922, %v2172
      %2174 = vmatprep.mubr.f32.mxu0 %v2069
      %2175 = vmatmul.mubr.f32.gmra.mxu0 %v1640
      %v2176 = vpop.f32.mrf.mxu0
      %v2177 = vadd.f32 %v1926, %v2176
      %v2178 = vpop.f32.mrf.mxu0
      %v2179 = vadd.f32 %v1928, %v2178
      %2180 = vmatprep.mubr.f32.mxu0 %v2072
      %2181 = vmatmul.mubr.f32.gmra.mxu0 %v1642
      %v2182 = vpop.f32.mrf.mxu0
      %v2183 = vadd.f32 %v1932, %v2182
      %v2184 = vpop.f32.mrf.mxu0
      %v2185 = vadd.f32 %v1934, %v2184
      %2186 = vmatprep.mubr.f32.mxu0 %v2075
      %2187 = vmatmul.mubr.f32.gmra.mxu0 %v1644
      %v2188 = vpop.f32.mrf.mxu0
      %v2189 = vadd.f32 %v1938, %v2188
      %v2190 = vpop.f32.mrf.mxu0
      %v2191 = vadd.f32 %v1940, %v2190
      %2192 = vmatprep.mubr.f32.mxu0 %v2078
      %2193 = vmatmul.mubr.f32.gmra.mxu0 %v1646
      %v2194 = vpop.f32.mrf.mxu0
      %v2195 = vadd.f32 %v1944, %v2194
      %v2196 = vpop.f32.mrf.mxu0
      %v2197 = vadd.f32 %v1946, %v2196
      %2198 = vmatprep.mubr.f32.mxu0 %v2081
      %2199 = vmatmul.mubr.f32.gmra.mxu0 %v1648
      %v2200 = vpop.f32.mrf.mxu0
      %v2201 = vadd.f32 %v1950, %v2200
      %v2202 = vpop.f32.mrf.mxu0
      %v2203 = vadd.f32 %v1952, %v2202
      %2204 = vdwg.mxu0
      %2205 = vmatprep.subr.mxu0 %v1830
      %2206 = vmatpush1.xpose.msra.mxu0 %v1632
      %2207 = vmatprep.subr.mxu0 %v1827
      %2208 = vmatpush1.xpose.msra.mxu0 %v1630
      %2209 = vmatprep.subr.mxu0 %v1824
      %2210 = vmatpush1.xpose.msra.mxu0 %v1628
      %2211 = vmatprep.subr.mxu0 %v1821
      %2212 = vmatpush1.xpose.msra.mxu0 %v1626
      %2213 = vmatprep.subr.mxu0 %v1818
      %2214 = vmatpush1.xpose.msra.mxu0 %v1624
      %2215 = vmatprep.subr.mxu0 %v1815
      %2216 = vmatpush1.xpose.msra.mxu0 %v1622
      %2217 = vmatprep.subr.mxu0 %v1812
      %2218 = vmatpush1.xpose.msra.mxu0 %v1620
      %2219 = vmatprep.subr.mxu0 %v1809
      %2220 = vmatpush1.xpose.msra.mxu0 %v1618
      %2221 = vmatprep.subr.mxu0 %v1806
      %2222 = vmatpush1.xpose.msra.mxu0 %v1616
      %2223 = vmatprep.subr.mxu0 %v1803
      %2224 = vmatpush1.xpose.msra.mxu0 %v1614
      %2225 = vmatprep.subr.mxu0 %v1800
      %2226 = vmatpush1.xpose.msra.mxu0 %v1612
      %2227 = vmatprep.subr.mxu0 %v1797
      %2228 = vmatpush1.xpose.msra.mxu0 %v1610
      %2229 = vmatprep.subr.mxu0 %v1794
      %2230 = vmatpush1.xpose.msra.mxu0 %v1608
      %2231 = vmatprep.subr.mxu0 %v1791
      %2232 = vmatpush1.xpose.msra.mxu0 %v1606
      %2233 = vmatprep.subr.mxu0 %v1788
      %2234 = vmatpush1.xpose.msra.mxu0 %v1604
      %2235 = vmatprep.subr.mxu0 %v1785
      %2236 = vmatpush1.xpose.msra.mxu0 %v1602
      %2237 = vmatprep.subr.mxu0 0.0
      %2238 = vmatpush2.xpose.msra.mxu0 0.0
      %2239 = vmatprep.subr.mxu0 0.0
      %2240 = vmatpush2.xpose.msra.mxu0 0.0
      %2241 = vmatprep.subr.mxu0 0.0
      %2242 = vmatpush2.xpose.msra.mxu0 0.0
      %2243 = vmatprep.subr.mxu0 0.0
      %2244 = vmatpush2.xpose.msra.mxu0 0.0
      %2245 = vmatprep.subr.mxu0 0.0
      %2246 = vmatpush2.xpose.msra.mxu0 0.0
      %2247 = vmatprep.subr.mxu0 0.0
      %2248 = vmatpush2.xpose.msra.mxu0 0.0
      %2249 = vmatprep.subr.mxu0 0.0
      %2250 = vmatpush2.xpose.msra.mxu0 0.0
      %2251 = vmatprep.subr.mxu0 0.0
      %2252 = vmatpush2.xpose.msra.mxu0 0.0
      %2253 = vmatprep.subr.mxu0 0.0
      %2254 = vmatpush2.xpose.msra.mxu0 0.0
      %2255 = vmatprep.subr.mxu0 0.0
      %2256 = vmatpush2.xpose.msra.mxu0 0.0
      %2257 = vmatprep.subr.mxu0 0.0
      %2258 = vmatpush2.xpose.msra.mxu0 0.0
      %2259 = vmatprep.subr.mxu0 0.0
      %2260 = vmatpush2.xpose.msra.mxu0 0.0
      %2261 = vmatprep.subr.mxu0 0.0
      %2262 = vmatpush2.xpose.msra.mxu0 0.0
      %2263 = vmatprep.subr.mxu0 0.0
      %2264 = vmatpush2.xpose.msra.mxu0 0.0
      %2265 = vmatprep.subr.mxu0 0.0
      %2266 = vmatpush2.xpose.msra.mxu0 0.0
      %2267 = vmatprep.subr.mxu0 0.0
      %2268 = vmatpush2.xpose.msra.mxu0 0.0
      %2269 = vmatprep.mubr.f32.mxu0 %v2060
      %2270 = vmatmul.mubr.f32.gmra.mxu0 %v1634
      %v2271 = vpop.f32.mrf.mxu0
      %v2272 = vadd.f32 %v2021, %v2271
      %v2273 = vpop.f32.mrf.mxu0
      %2274 = vmatprep.mubr.f32.mxu0 %v2063
      %2275 = vmatmul.mubr.f32.gmra.mxu0 %v1636
      %v2276 = vpop.f32.mrf.mxu0
      %v2277 = vadd.f32 %v2026, %v2276
      %v2278 = vpop.f32.mrf.mxu0
      %2279 = vmatprep.mubr.f32.mxu0 %v2066
      %2280 = vmatmul.mubr.f32.gmra.mxu0 %v1638
      %v2281 = vpop.f32.mrf.mxu0
      %v2282 = vadd.f32 %v2031, %v2281
      %v2283 = vpop.f32.mrf.mxu0
      %2284 = vmatprep.mubr.f32.mxu0 %v2069
      %2285 = vmatmul.mubr.f32.gmra.mxu0 %v1640
      %v2286 = vpop.f32.mrf.mxu0
      %v2287 = vadd.f32 %v2036, %v2286
      %v2288 = vpop.f32.mrf.mxu0
      %2289 = vmatprep.mubr.f32.mxu0 %v2072
      %2290 = vmatmul.mubr.f32.gmra.mxu0 %v1642
      %v2291 = vpop.f32.mrf.mxu0
      %v2292 = vadd.f32 %v2041, %v2291
      %v2293 = vpop.f32.mrf.mxu0
      %2294 = vmatprep.mubr.f32.mxu0 %v2075
      %2295 = vmatmul.mubr.f32.gmra.mxu0 %v1644
      %v2296 = vpop.f32.mrf.mxu0
      %v2297 = vadd.f32 %v2046, %v2296
      %v2298 = vpop.f32.mrf.mxu0
      %2299 = vmatprep.mubr.f32.mxu0 %v2078
      %2300 = vmatmul.mubr.f32.gmra.mxu0 %v1646
      %v2301 = vpop.f32.mrf.mxu0
      %v2302 = vadd.f32 %v2051, %v2301
      %v2303 = vpop.f32.mrf.mxu0
      %2304 = vmatprep.mubr.f32.mxu0 %v2081
      %2305 = vmatmul.mubr.f32.gmra.mxu0 %v1648
      %v2306 = vpop.f32.mrf.mxu0
      %v2307 = vadd.f32 %v2056, %v2306
      %v2308 = vpop.f32.mrf.mxu0
      %2309 = vdwg.mxu0
      %v2310 = vld [vmem:[#allocation2 + $0x60] sm:$0xff]
      %v2311 = vld [vmem:[#allocation2 + $0x68] sm:$0xff]
      %v2312 = vld [vmem:[#allocation2 + $0x70] sm:$0xff]
      %v2313 = vld [vmem:[#allocation2 + $0x78] sm:$0xff]
      %v2314 = vld [vmem:[#allocation2 + $0x80] sm:$0xff]
      %v2315 = vld [vmem:[#allocation2 + $0x88] sm:$0xff]
      %v2316 = vld [vmem:[#allocation2 + $0x90] sm:$0xff]
      %v2317 = vld [vmem:[#allocation2 + $0x98] sm:$0xff]
      %v2318 = vld [vmem:[#allocation2 + $0xa0] sm:$0xff]
      %v2319 = vld [vmem:[#allocation2 + $0xa8] sm:$0xff]
      %v2320 = vld [vmem:[#allocation2 + $0xb0] sm:$0xff]
      %v2321 = vld [vmem:[#allocation2 + $0xb8] sm:$0xff]
      %v2322 = vld [vmem:[#allocation2 + $0xc0] sm:$0xff]
      %v2323 = vld [vmem:[#allocation2 + $0xc8] sm:$0xff]
      %v2324 = vld [vmem:[#allocation2 + $0xd0] sm:$0xff]
      %v2325 = vld [vmem:[#allocation2 + $0xd8] sm:$0xff]
      %v2326 = vld [vmem:[#allocation2 + $0xe0] sm:$0xff]
      %v2327 = vld [vmem:[#allocation2 + $0xe8] sm:$0xff]
      %v2328 = vld [vmem:[#allocation2 + $0xf0] sm:$0xff]
      %v2329 = vld [vmem:[#allocation2 + $0xf8] sm:$0xff]
      %v2330 = vld [vmem:[#allocation2 + $0x100] sm:$0xff]
      %v2331 = vld [vmem:[#allocation2 + $0x108] sm:$0xff]
      %v2332 = vld [vmem:[#allocation2 + $0x110] sm:$0xff]
      %v2333 = vld [vmem:[#allocation2 + $0x118] sm:$0xff]
      %v2334 = vld [vmem:[#allocation2 + $0x120] sm:$0xff]
      %v2335 = vld [vmem:[#allocation2 + $0x128] sm:$0xff]
      %v2336 = vld [vmem:[#allocation2 + $0x130] sm:$0xff]
      %v2337 = vld [vmem:[#allocation2 + $0x138] sm:$0xff]
      %v2338 = vld [vmem:[#allocation2 + $0x140] sm:$0xff]
      %v2339 = vld [vmem:[#allocation2 + $0x148] sm:$0xff]
      %v2340 = vld [vmem:[#allocation2 + $0x150] sm:$0xff]
      %v2341 = vld [vmem:[#allocation2 + $0x158] sm:$0xff]
      %v2342 = vld [vmem:[#allocation2 + $0x160] sm:$0xff]
      %v2343 = vld [vmem:[#allocation2 + $0x168] sm:$0xff]
      %v2344 = vld [vmem:[#allocation2 + $0x170] sm:$0xff]
      %v2345 = vld [vmem:[#allocation2 + $0x178] sm:$0xff]
      %v2346 = vld [vmem:[#allocation2 + $0x180] sm:$0xff]
      %v2347 = vld [vmem:[#allocation2 + $0x188] sm:$0xff]
      %v2348 = vld [vmem:[#allocation2 + $0x190] sm:$0xff]
      %v2349 = vld [vmem:[#allocation2 + $0x198] sm:$0xff]
      %v2350 = vld [vmem:[#allocation2 + $0x1a0] sm:$0xff]
      %v2351 = vld [vmem:[#allocation2 + $0x1a8] sm:$0xff]
      %v2352 = vld [vmem:[#allocation2 + $0x1b0] sm:$0xff]
      %v2353 = vld [vmem:[#allocation2 + $0x1b8] sm:$0xff]
      %v2354 = vld [vmem:[#allocation2 + $0x1c0] sm:$0xff]
      %v2355 = vld [vmem:[#allocation2 + $0x1c8] sm:$0xff]
      %v2356 = vld [vmem:[#allocation2 + $0x1d0] sm:$0xff]
      %v2357 = vld [vmem:[#allocation2 + $0x1d8] sm:$0xff]
      %v2358 = vld [vmem:[#allocation2 + $0x1e0] sm:$0xff]
      %v2359 = vld [vmem:[#allocation2 + $0x1e8] sm:$0xff]
      %v2360 = vld [vmem:[#allocation2 + $0x1f0] sm:$0xff]
      %v2361 = vld [vmem:[#allocation2 + $0x1f8] sm:$0xff]
      %v2362 = vld [vmem:[#allocation2 + $0x200] sm:$0xff]
      %v2363 = vld [vmem:[#allocation2 + $0x208] sm:$0xff]
      %v2364 = vld [vmem:[#allocation2 + $0x210] sm:$0xff]
      %v2365 = vld [vmem:[#allocation2 + $0x218] sm:$0xff]
      %v2366 = vld [vmem:[#allocation2 + $0x220] sm:$0xff]
      %v2367 = vld [vmem:[#allocation2 + $0x228] sm:$0xff]
      %v2368 = vld [vmem:[#allocation2 + $0x230] sm:$0xff]
      %v2369 = vld [vmem:[#allocation2 + $0x238] sm:$0xff]
      %v2370 = vld [vmem:[#allocation2 + $0x240] sm:$0xff]
      %v2371 = vld [vmem:[#allocation2 + $0x248] sm:$0xff]
      %v2372 = vld [vmem:[#allocation2 + $0x250] sm:$0xff]
      %v2373 = vld [vmem:[#allocation2 + $0x258] sm:$0xff]
      %v2374 = vld [vmem:[#allocation2 + $0x260] sm:$0xff]
      %v2375 = vld [vmem:[#allocation2 + $0x268] sm:$0xff]
      %v2376 = vld [vmem:[#allocation2 + $0x270] sm:$0xff]
      %v2377 = vld [vmem:[#allocation2 + $0x278] sm:$0xff]
      %v2378 = vld [vmem:[#allocation2 + $0x280] sm:$0xff]
      %v2379 = vld [vmem:[#allocation2 + $0x288] sm:$0xff]
      %v2380 = vld [vmem:[#allocation2 + $0x290] sm:$0xff]
      %v2381 = vld [vmem:[#allocation2 + $0x298] sm:$0xff]
      %v2382 = vld [vmem:[#allocation2 + $0x2a0] sm:$0xff]
      %v2383 = vld [vmem:[#allocation2 + $0x2a8] sm:$0xff]
      %v2384 = vld [vmem:[#allocation2 + $0x2b0] sm:$0xff]
      %v2385 = vld [vmem:[#allocation2 + $0x2b8] sm:$0xff]
      %v2386 = vld [vmem:[#allocation2 + $0x2c0] sm:$0xff]
      %v2387 = vld [vmem:[#allocation2 + $0x2c8] sm:$0xff]
      %v2388 = vld [vmem:[#allocation2 + $0x2d0] sm:$0xff]
      %v2389 = vld [vmem:[#allocation2 + $0x2d8] sm:$0xff]
      %v2390 = vld [vmem:[#allocation2 + $0x2e0] sm:$0xff]
      %v2391 = vld [vmem:[#allocation2 + $0x2e8] sm:$0xff]
      %v2392 = vld [vmem:[#allocation2 + $0x2f0] sm:$0xff]
      %v2393 = vld [vmem:[#allocation2 + $0x2f8] sm:$0xff]
      %v2394 = vld [vmem:[#allocation2 + $0x300] sm:$0xff]
      %v2395 = vld [vmem:[#allocation2 + $0x308] sm:$0xff]
      %v2396 = vld [vmem:[#allocation2 + $0x310] sm:$0xff]
      %v2397 = vld [vmem:[#allocation2 + $0x318] sm:$0xff]
      %v2398 = vld [vmem:[#allocation2 + $0x320] sm:$0xff]
      %v2399 = vld [vmem:[#allocation2 + $0x328] sm:$0xff]
      %v2400 = vld [vmem:[#allocation2 + $0x330] sm:$0xff]
      %v2401 = vld [vmem:[#allocation2 + $0x338] sm:$0xff]
      %v2402 = vld [vmem:[#allocation2 + $0x340] sm:$0xff]
      %v2403 = vld [vmem:[#allocation2 + $0x348] sm:$0xff]
      %v2404 = vld [vmem:[#allocation2 + $0x350] sm:$0xff]
      %v2405 = vld [vmem:[#allocation2 + $0x358] sm:$0xff]
      %s2406 = scalar_lea.vmem %s2, 256
      %v2407 = vld [vmem:[%s2406] sm:$0xff]
      %v2408 = vld [vmem:[%s2406 + $0x8] sm:$0xff]
      %v2409 = vld [vmem:[%s2406 + $0x10] sm:$0xff]
      %v2410 = vld [vmem:[%s2406 + $0x18] sm:$0xff]
      %v2411 = vld [vmem:[%s2406 + $0x20] sm:$0xff]
      %v2412 = vld [vmem:[%s2406 + $0x28] sm:$0xff]
      %v2413 = vld [vmem:[%s2406 + $0x30] sm:$0xff]
      %v2414 = vld [vmem:[%s2406 + $0x38] sm:$0xff]
      %v2415 = vld [vmem:[%s2406 + $0x40] sm:$0xff]
      %v2416 = vld [vmem:[%s2406 + $0x48] sm:$0xff]
      %v2417 = vld [vmem:[%s2406 + $0x50] sm:$0xff]
      %v2418 = vld [vmem:[%s2406 + $0x58] sm:$0xff]
      %v2419 = vld [vmem:[%s2406 + $0x60] sm:$0xff]
      %v2420 = vld [vmem:[%s2406 + $0x68] sm:$0xff]
      %v2421 = vld [vmem:[%s2406 + $0x70] sm:$0xff]
      %v2422 = vld [vmem:[%s2406 + $0x78] sm:$0xff]
      %v2424 = vsel %vm1047, %v2408, 0
      %v2427 = vsel %vm1047, %v2410, 0
      %v2430 = vsel %vm1047, %v2412, 0
      %v2433 = vsel %vm1047, %v2414, 0
      %v2436 = vsel %vm1047, %v2416, 0
      %v2439 = vsel %vm1047, %v2418, 0
      %v2442 = vsel %vm1047, %v2420, 0
      %v2445 = vsel %vm1047, %v2422, 0
      %v2448 = vsel %vm1047, %v2311, 0
      %v2451 = vsel %vm1047, %v2313, 0
      %v2454 = vsel %vm1047, %v2315, 0
      %v2457 = vsel %vm1047, %v2317, 0
      %v2460 = vsel %vm1047, %v2319, 0
      %v2463 = vsel %vm1047, %v2321, 0
      %v2466 = vsel %vm1047, %v2323, 0
      %v2469 = vsel %vm1047, %v2325, 0
      %v2472 = vsel %vm1047, %v2327, 0
      %v2475 = vsel %vm1047, %v2329, 0
      %v2478 = vsel %vm1047, %v2331, 0
      %v2481 = vsel %vm1047, %v2333, 0
      %v2484 = vsel %vm1047, %v2335, 0
      %v2487 = vsel %vm1047, %v2337, 0
      %v2490 = vsel %vm1047, %v2339, 0
      %v2493 = vsel %vm1047, %v2341, 0
      %v2496 = vsel %vm1047, %v2343, 0
      %v2499 = vsel %vm1047, %v2345, 0
      %v2502 = vsel %vm1047, %v2347, 0
      %v2505 = vsel %vm1047, %v2349, 0
      %v2508 = vsel %vm1047, %v2351, 0
      %v2511 = vsel %vm1047, %v2353, 0
      %v2514 = vsel %vm1047, %v2355, 0
      %v2517 = vsel %vm1047, %v2357, 0
      %v2520 = vsel %vm1047, %v2359, 0
      %v2523 = vsel %vm1047, %v2361, 0
      %v2526 = vsel %vm1047, %v2363, 0
      %v2529 = vsel %vm1047, %v2365, 0
      %v2532 = vsel %vm1047, %v2367, 0
      %v2535 = vsel %vm1047, %v2369, 0
      %v2538 = vsel %vm1047, %v2371, 0
      %v2541 = vsel %vm1047, %v2373, 0
      %v2544 = vsel %vm1047, %v2375, 0
      %v2547 = vsel %vm1047, %v2377, 0
      %v2550 = vsel %vm1047, %v2379, 0
      %v2553 = vsel %vm1047, %v2381, 0
      %v2556 = vsel %vm1047, %v2383, 0
      %v2559 = vsel %vm1047, %v2385, 0
      %v2562 = vsel %vm1047, %v2387, 0
      %v2565 = vsel %vm1047, %v2389, 0
      %v2568 = vsel %vm1047, %v2391, 0
      %v2571 = vsel %vm1047, %v2393, 0
      %v2574 = vsel %vm1047, %v2395, 0
      %v2577 = vsel %vm1047, %v2397, 0
      %v2580 = vsel %vm1047, %v2399, 0
      %v2583 = vsel %vm1047, %v2401, 0
      %v2586 = vsel %vm1047, %v2403, 0
      %v2589 = vsel %vm1047, %v2405, 0
      %2591 = vmatprep.subr.mxu0 %v2493
      %2592 = vmatpush1.xpose.msra.mxu0 %v2340
      %2593 = vmatprep.subr.mxu0 %v2490
      %2594 = vmatpush1.xpose.msra.mxu0 %v2338
      %2595 = vmatprep.subr.mxu0 %v2487
      %2596 = vmatpush1.xpose.msra.mxu0 %v2336
      %2597 = vmatprep.subr.mxu0 %v2484
      %2598 = vmatpush1.xpose.msra.mxu0 %v2334
      %2599 = vmatprep.subr.mxu0 %v2481
      %2600 = vmatpush1.xpose.msra.mxu0 %v2332
      %2601 = vmatprep.subr.mxu0 %v2478
      %2602 = vmatpush1.xpose.msra.mxu0 %v2330
      %2603 = vmatprep.subr.mxu0 %v2475
      %2604 = vmatpush1.xpose.msra.mxu0 %v2328
      %2605 = vmatprep.subr.mxu0 %v2472
      %2606 = vmatpush1.xpose.msra.mxu0 %v2326
      %2607 = vmatprep.subr.mxu0 %v2469
      %2608 = vmatpush1.xpose.msra.mxu0 %v2324
      %2609 = vmatprep.subr.mxu0 %v2466
      %2610 = vmatpush1.xpose.msra.mxu0 %v2322
      %2611 = vmatprep.subr.mxu0 %v2463
      %2612 = vmatpush1.xpose.msra.mxu0 %v2320
      %2613 = vmatprep.subr.mxu0 %v2460
      %2614 = vmatpush1.xpose.msra.mxu0 %v2318
      %2615 = vmatprep.subr.mxu0 %v2457
      %2616 = vmatpush1.xpose.msra.mxu0 %v2316
      %2617 = vmatprep.subr.mxu0 %v2454
      %2618 = vmatpush1.xpose.msra.mxu0 %v2314
      %2619 = vmatprep.subr.mxu0 %v2451
      %2620 = vmatpush1.xpose.msra.mxu0 %v2312
      %2621 = vmatprep.subr.mxu0 %v2448
      %2622 = vmatpush1.xpose.msra.mxu0 %v2310
      %2623 = vmatprep.subr.mxu0 %v2541
      %2624 = vmatpush2.xpose.msra.mxu0 %v2372
      %2625 = vmatprep.subr.mxu0 %v2538
      %2626 = vmatpush2.xpose.msra.mxu0 %v2370
      %2627 = vmatprep.subr.mxu0 %v2535
      %2628 = vmatpush2.xpose.msra.mxu0 %v2368
      %2629 = vmatprep.subr.mxu0 %v2532
      %2630 = vmatpush2.xpose.msra.mxu0 %v2366
      %2631 = vmatprep.subr.mxu0 %v2529
      %2632 = vmatpush2.xpose.msra.mxu0 %v2364
      %2633 = vmatprep.subr.mxu0 %v2526
      %2634 = vmatpush2.xpose.msra.mxu0 %v2362
      %2635 = vmatprep.subr.mxu0 %v2523
      %2636 = vmatpush2.xpose.msra.mxu0 %v2360
      %2637 = vmatprep.subr.mxu0 %v2520
      %2638 = vmatpush2.xpose.msra.mxu0 %v2358
      %2639 = vmatprep.subr.mxu0 %v2517
      %2640 = vmatpush2.xpose.msra.mxu0 %v2356
      %2641 = vmatprep.subr.mxu0 %v2514
      %2642 = vmatpush2.xpose.msra.mxu0 %v2354
      %2643 = vmatprep.subr.mxu0 %v2511
      %2644 = vmatpush2.xpose.msra.mxu0 %v2352
      %2645 = vmatprep.subr.mxu0 %v2508
      %2646 = vmatpush2.xpose.msra.mxu0 %v2350
      %2647 = vmatprep.subr.mxu0 %v2505
      %2648 = vmatpush2.xpose.msra.mxu0 %v2348
      %2649 = vmatprep.subr.mxu0 %v2502
      %2650 = vmatpush2.xpose.msra.mxu0 %v2346
      %2651 = vmatprep.subr.mxu0 %v2499
      %2652 = vmatpush2.xpose.msra.mxu0 %v2344
      %2653 = vmatprep.subr.mxu0 %v2496
      %2654 = vmatpush2.xpose.msra.mxu0 %v2342
      %2655 = vmatprep.mubr.f32.mxu0 %v2424
      %2656 = vmatmul.mubr.f32.gmra.mxu0 %v2407
      %v2657 = vpop.f32.mrf.mxu0
      %v2658 = vadd.f32 0.0, %v2657
      %v2659 = vpop.f32.mrf.mxu0
      %v2660 = vadd.f32 0.0, %v2659
      %2661 = vmatprep.mubr.f32.mxu0 %v2427
      %2662 = vmatmul.mubr.f32.gmra.mxu0 %v2409
      %v2663 = vpop.f32.mrf.mxu0
      %v2664 = vadd.f32 0.0, %v2663
      %v2665 = vpop.f32.mrf.mxu0
      %v2666 = vadd.f32 0.0, %v2665
      %2667 = vmatprep.mubr.f32.mxu0 %v2430
      %2668 = vmatmul.mubr.f32.gmra.mxu0 %v2411
      %v2669 = vpop.f32.mrf.mxu0
      %v2670 = vadd.f32 0.0, %v2669
      %v2671 = vpop.f32.mrf.mxu0
      %v2672 = vadd.f32 0.0, %v2671
      %2673 = vmatprep.mubr.f32.mxu0 %v2433
      %2674 = vmatmul.mubr.f32.gmra.mxu0 %v2413
      %v2675 = vpop.f32.mrf.mxu0
      %v2676 = vadd.f32 0.0, %v2675
      %v2677 = vpop.f32.mrf.mxu0
      %v2678 = vadd.f32 0.0, %v2677
      %2679 = vmatprep.mubr.f32.mxu0 %v2436
      %2680 = vmatmul.mubr.f32.gmra.mxu0 %v2415
      %v2681 = vpop.f32.mrf.mxu0
      %v2682 = vadd.f32 0.0, %v2681
      %v2683 = vpop.f32.mrf.mxu0
      %v2684 = vadd.f32 0.0, %v2683
      %2685 = vmatprep.mubr.f32.mxu0 %v2439
      %2686 = vmatmul.mubr.f32.gmra.mxu0 %v2417
      %v2687 = vpop.f32.mrf.mxu0
      %v2688 = vadd.f32 0.0, %v2687
      %v2689 = vpop.f32.mrf.mxu0
      %v2690 = vadd.f32 0.0, %v2689
      %2691 = vmatprep.mubr.f32.mxu0 %v2442
      %2692 = vmatmul.mubr.f32.gmra.mxu0 %v2419
      %v2693 = vpop.f32.mrf.mxu0
      %v2694 = vadd.f32 0.0, %v2693
      %v2695 = vpop.f32.mrf.mxu0
      %v2696 = vadd.f32 0.0, %v2695
      %2697 = vmatprep.mubr.f32.mxu0 %v2445
      %2698 = vmatmul.mubr.f32.gmra.mxu0 %v2421
      %v2699 = vpop.f32.mrf.mxu0
      %v2700 = vadd.f32 0.0, %v2699
      %v2701 = vpop.f32.mrf.mxu0
      %v2702 = vadd.f32 0.0, %v2701
      %2703 = vdwg.mxu0
      %2704 = vmatprep.subr.mxu0 %v2589
      %2705 = vmatpush1.xpose.msra.mxu0 %v2404
      %2706 = vmatprep.subr.mxu0 %v2586
      %2707 = vmatpush1.xpose.msra.mxu0 %v2402
      %2708 = vmatprep.subr.mxu0 %v2583
      %2709 = vmatpush1.xpose.msra.mxu0 %v2400
      %2710 = vmatprep.subr.mxu0 %v2580
      %2711 = vmatpush1.xpose.msra.mxu0 %v2398
      %2712 = vmatprep.subr.mxu0 %v2577
      %2713 = vmatpush1.xpose.msra.mxu0 %v2396
      %2714 = vmatprep.subr.mxu0 %v2574
      %2715 = vmatpush1.xpose.msra.mxu0 %v2394
      %2716 = vmatprep.subr.mxu0 %v2571
      %2717 = vmatpush1.xpose.msra.mxu0 %v2392
      %2718 = vmatprep.subr.mxu0 %v2568
      %2719 = vmatpush1.xpose.msra.mxu0 %v2390
      %2720 = vmatprep.subr.mxu0 %v2565
      %2721 = vmatpush1.xpose.msra.mxu0 %v2388
      %2722 = vmatprep.subr.mxu0 %v2562
      %2723 = vmatpush1.xpose.msra.mxu0 %v2386
      %2724 = vmatprep.subr.mxu0 %v2559
      %2725 = vmatpush1.xpose.msra.mxu0 %v2384
      %2726 = vmatprep.subr.mxu0 %v2556
      %2727 = vmatpush1.xpose.msra.mxu0 %v2382
      %2728 = vmatprep.subr.mxu0 %v2553
      %2729 = vmatpush1.xpose.msra.mxu0 %v2380
      %2730 = vmatprep.subr.mxu0 %v2550
      %2731 = vmatpush1.xpose.msra.mxu0 %v2378
      %2732 = vmatprep.subr.mxu0 %v2547
      %2733 = vmatpush1.xpose.msra.mxu0 %v2376
      %2734 = vmatprep.subr.mxu0 %v2544
      %2735 = vmatpush1.xpose.msra.mxu0 %v2374
      %2736 = vmatprep.subr.mxu0 0.0
      %2737 = vmatpush2.xpose.msra.mxu0 0.0
      %2738 = vmatprep.subr.mxu0 0.0
      %2739 = vmatpush2.xpose.msra.mxu0 0.0
      %2740 = vmatprep.subr.mxu0 0.0
      %2741 = vmatpush2.xpose.msra.mxu0 0.0
      %2742 = vmatprep.subr.mxu0 0.0
      %2743 = vmatpush2.xpose.msra.mxu0 0.0
      %2744 = vmatprep.subr.mxu0 0.0
      %2745 = vmatpush2.xpose.msra.mxu0 0.0
      %2746 = vmatprep.subr.mxu0 0.0
      %2747 = vmatpush2.xpose.msra.mxu0 0.0
      %2748 = vmatprep.subr.mxu0 0.0
      %2749 = vmatpush2.xpose.msra.mxu0 0.0
      %2750 = vmatprep.subr.mxu0 0.0
      %2751 = vmatpush2.xpose.msra.mxu0 0.0
      %2752 = vmatprep.subr.mxu0 0.0
      %2753 = vmatpush2.xpose.msra.mxu0 0.0
      %2754 = vmatprep.subr.mxu0 0.0
      %2755 = vmatpush2.xpose.msra.mxu0 0.0
      %2756 = vmatprep.subr.mxu0 0.0
      %2757 = vmatpush2.xpose.msra.mxu0 0.0
      %2758 = vmatprep.subr.mxu0 0.0
      %2759 = vmatpush2.xpose.msra.mxu0 0.0
      %2760 = vmatprep.subr.mxu0 0.0
      %2761 = vmatpush2.xpose.msra.mxu0 0.0
      %2762 = vmatprep.subr.mxu0 0.0
      %2763 = vmatpush2.xpose.msra.mxu0 0.0
      %2764 = vmatprep.subr.mxu0 0.0
      %2765 = vmatpush2.xpose.msra.mxu0 0.0
      %2766 = vmatprep.subr.mxu0 0.0
      %2767 = vmatpush2.xpose.msra.mxu0 0.0
      %2768 = vmatprep.mubr.f32.mxu0 %v2424
      %2769 = vmatmul.mubr.f32.gmra.mxu0 %v2407
      %v2770 = vpop.f32.mrf.mxu0
      %v2771 = vadd.f32 0.0, %v2770
      %v2772 = vpop.f32.mrf.mxu0
      %2773 = vmatprep.mubr.f32.mxu0 %v2427
      %2774 = vmatmul.mubr.f32.gmra.mxu0 %v2409
      %v2775 = vpop.f32.mrf.mxu0
      %v2776 = vadd.f32 0.0, %v2775
      %v2777 = vpop.f32.mrf.mxu0
      %2778 = vmatprep.mubr.f32.mxu0 %v2430
      %2779 = vmatmul.mubr.f32.gmra.mxu0 %v2411
      %v2780 = vpop.f32.mrf.mxu0
      %v2781 = vadd.f32 0.0, %v2780
      %v2782 = vpop.f32.mrf.mxu0
      %2783 = vmatprep.mubr.f32.mxu0 %v2433
      %2784 = vmatmul.mubr.f32.gmra.mxu0 %v2413
      %v2785 = vpop.f32.mrf.mxu0
      %v2786 = vadd.f32 0.0, %v2785
      %v2787 = vpop.f32.mrf.mxu0
      %2788 = vmatprep.mubr.f32.mxu0 %v2436
      %2789 = vmatmul.mubr.f32.gmra.mxu0 %v2415
      %v2790 = vpop.f32.mrf.mxu0
      %v2791 = vadd.f32 0.0, %v2790
      %v2792 = vpop.f32.mrf.mxu0
      %2793 = vmatprep.mubr.f32.mxu0 %v2439
      %2794 = vmatmul.mubr.f32.gmra.mxu0 %v2417
      %v2795 = vpop.f32.mrf.mxu0
      %v2796 = vadd.f32 0.0, %v2795
      %v2797 = vpop.f32.mrf.mxu0
      %2798 = vmatprep.mubr.f32.mxu0 %v2442
      %2799 = vmatmul.mubr.f32.gmra.mxu0 %v2419
      %v2800 = vpop.f32.mrf.mxu0
      %v2801 = vadd.f32 0.0, %v2800
      %v2802 = vpop.f32.mrf.mxu0
      %2803 = vmatprep.mubr.f32.mxu0 %v2445
      %2804 = vmatmul.mubr.f32.gmra.mxu0 %v2421
      %v2805 = vpop.f32.mrf.mxu0
      %v2806 = vadd.f32 0.0, %v2805
      %v2807 = vpop.f32.mrf.mxu0
      %2808 = vdwg.mxu0
      %v2809 = vadd.f32 %v2159, %v2658
      %v2810 = vadd.f32 %v2161, %v2660
      %v2811 = vadd.f32 %v2272, %v2771
      %v2812 = vadd.f32 %v2165, %v2664
      %v2813 = vadd.f32 %v2167, %v2666
      %v2814 = vadd.f32 %v2277, %v2776
      %v2815 = vadd.f32 %v2171, %v2670
      %v2816 = vadd.f32 %v2173, %v2672
      %v2817 = vadd.f32 %v2282, %v2781
      %v2818 = vadd.f32 %v2177, %v2676
      %v2819 = vadd.f32 %v2179, %v2678
      %v2820 = vadd.f32 %v2287, %v2786
      %v2821 = vadd.f32 %v2183, %v2682
      %v2822 = vadd.f32 %v2185, %v2684
      %v2823 = vadd.f32 %v2292, %v2791
      %v2824 = vadd.f32 %v2189, %v2688
      %v2825 = vadd.f32 %v2191, %v2690
      %v2826 = vadd.f32 %v2297, %v2796
      %v2827 = vadd.f32 %v2195, %v2694
      %v2828 = vadd.f32 %v2197, %v2696
      %v2829 = vadd.f32 %v2302, %v2801
      %v2830 = vadd.f32 %v2201, %v2700
      %v2831 = vadd.f32 %v2203, %v2702
      %v2832 = vadd.f32 %v2307, %v2806
      %v2833 = vld [vmem:[%s3] sm:$0xff]
      %v2834 = vld [vmem:[%s3 + $0x8] sm:$0xff]
      %v2835 = vld [vmem:[%s3 + $0x10] sm:$0xff]
      %v2836 = vld [vmem:[%s3 + $0x18] sm:$0xff]
      %v2837 = vld [vmem:[%s3 + $0x20] sm:$0xff]
      %v2838 = vld [vmem:[%s3 + $0x28] sm:$0xff]
      %v2839 = vld [vmem:[%s3 + $0x30] sm:$0xff]
      %v2840 = vld [vmem:[%s3 + $0x38] sm:$0xff]
      %2842 = vset.pattern.permute.xlu0 0
      %2843 = vperm.xlu0 %2842, %v2833
      %v2844 = vpop.permute.xlu0 %2843
      %2847 = vset.pattern.permute.xlu0 0
      %2848 = vperm.xlu0 %2847, %v2834
      %v2849 = vpop.permute.xlu0 %2848
      %2852 = vset.pattern.permute.xlu0 0
      %2853 = vperm.xlu0 %2852, %v2835
      %v2854 = vpop.permute.xlu0 %2853
      %2857 = vset.pattern.permute.xlu0 0
      %2858 = vperm.xlu0 %2857, %v2836
      %v2859 = vpop.permute.xlu0 %2858
      %2862 = vset.pattern.permute.xlu0 0
      %2863 = vperm.xlu0 %2862, %v2837
      %v2864 = vpop.permute.xlu0 %2863
      %2867 = vset.pattern.permute.xlu0 0
      %2868 = vperm.xlu0 %2867, %v2838
      %v2869 = vpop.permute.xlu0 %2868
      %2872 = vset.pattern.permute.xlu0 0
      %2873 = vperm.xlu0 %2872, %v2839
      %v2874 = vpop.permute.xlu0 %2873
      %2877 = vset.pattern.permute.xlu0 0
      %2878 = vperm.xlu0 %2877, %v2840
      %v2879 = vpop.permute.xlu0 %2878
      %v2881 = vadd.f32 %v2809, %v2844
      %v2882 = vadd.f32 %v2810, %v2844
      %v2883 = vadd.f32 %v2811, %v2844
      %v2884 = vadd.f32 %v2812, %v2849
      %v2885 = vadd.f32 %v2813, %v2849
      %v2886 = vadd.f32 %v2814, %v2849
      %v2887 = vadd.f32 %v2815, %v2854
      %v2888 = vadd.f32 %v2816, %v2854
      %v2889 = vadd.f32 %v2817, %v2854
      %v2890 = vadd.f32 %v2818, %v2859
      %v2891 = vadd.f32 %v2819, %v2859
      %v2892 = vadd.f32 %v2820, %v2859
      %v2893 = vadd.f32 %v2821, %v2864
      %v2894 = vadd.f32 %v2822, %v2864
      %v2895 = vadd.f32 %v2823, %v2864
      %v2896 = vadd.f32 %v2824, %v2869
      %v2897 = vadd.f32 %v2825, %v2869
      %v2898 = vadd.f32 %v2826, %v2869
      %v2899 = vadd.f32 %v2827, %v2874
      %v2900 = vadd.f32 %v2828, %v2874
      %v2901 = vadd.f32 %v2829, %v2874
      %v2902 = vadd.f32 %v2830, %v2879
      %v2903 = vadd.f32 %v2831, %v2879
      %v2904 = vadd.f32 %v2832, %v2879
      %v2905 = vmax.f32 %v2881, 0.0
      %v2906 = vmax.f32 %v2882, 0.0
      %v2907 = vmax.f32 %v2883, 0.0
      %v2908 = vmax.f32 %v2884, 0.0
      %v2909 = vmax.f32 %v2885, 0.0
      %v2910 = vmax.f32 %v2886, 0.0
      %v2911 = vmax.f32 %v2887, 0.0
      %v2912 = vmax.f32 %v2888, 0.0
      %v2913 = vmax.f32 %v2889, 0.0
      %v2914 = vmax.f32 %v2890, 0.0
      %v2915 = vmax.f32 %v2891, 0.0
      %v2916 = vmax.f32 %v2892, 0.0
      %v2917 = vmax.f32 %v2893, 0.0
      %v2918 = vmax.f32 %v2894, 0.0
      %v2919 = vmax.f32 %v2895, 0.0
      %v2920 = vmax.f32 %v2896, 0.0
      %v2921 = vmax.f32 %v2897, 0.0
      %v2922 = vmax.f32 %v2898, 0.0
      %v2923 = vmax.f32 %v2899, 0.0
      %v2924 = vmax.f32 %v2900, 0.0
      %v2925 = vmax.f32 %v2901, 0.0
      %v2926 = vmax.f32 %v2902, 0.0
      %v2927 = vmax.f32 %v2903, 0.0
      %v2928 = vmax.f32 %v2904, 0.0
      %2929 = vst [vmem:[%s197] sm:$0xff] %v2905
      %2930 = vst [vmem:[%s197 + $0x8] sm:$0xff] %v2906
      %2931 = vst [vmem:[%s197 + $0x10] sm:$0xff] %v2907
      %2932 = vst [vmem:[%s197 + $0x18] sm:$0xff] %v2908
      %2933 = vst [vmem:[%s197 + $0x20] sm:$0xff] %v2909
      %2934 = vst [vmem:[%s197 + $0x28] sm:$0xff] %v2910
      %2935 = vst [vmem:[%s197 + $0x30] sm:$0xff] %v2911
      %2936 = vst [vmem:[%s197 + $0x38] sm:$0xff] %v2912
      %2937 = vst [vmem:[%s197 + $0x40] sm:$0xff] %v2913
      %2938 = vst [vmem:[%s197 + $0x48] sm:$0xff] %v2914
      %2939 = vst [vmem:[%s197 + $0x50] sm:$0xff] %v2915
      %2940 = vst [vmem:[%s197 + $0x58] sm:$0xff] %v2916
      %2941 = vst [vmem:[%s197 + $0x60] sm:$0xff] %v2917
      %2942 = vst [vmem:[%s197 + $0x68] sm:$0xff] %v2918
      %2943 = vst [vmem:[%s197 + $0x70] sm:$0xff] %v2919
      %2944 = vst [vmem:[%s197 + $0x78] sm:$0xff] %v2920
      %2945 = vst [vmem:[%s197 + $0x80] sm:$0xff] %v2921
      %2946 = vst [vmem:[%s197 + $0x88] sm:$0xff] %v2922
      %2947 = vst [vmem:[%s197 + $0x90] sm:$0xff] %v2923
      %2948 = vst [vmem:[%s197 + $0x98] sm:$0xff] %v2924
      %2949 = vst [vmem:[%s197 + $0xa0] sm:$0xff] %v2925
      %2950 = vst [vmem:[%s197 + $0xa8] sm:$0xff] %v2926
      %2951 = vst [vmem:[%s197 + $0xb0] sm:$0xff] %v2927
      %2952 = vst [vmem:[%s197 + $0xb8] sm:$0xff] %v2928
      %p2953 = scmp.lt.s32.totalorder %s15, 1
      %s2954 = scalar_select %p2953, %s15, 1
      %s2955 = smul.addr %s2954, 24
      %s2956 = smul.addr %s2955, 8
      %s2957 = scalar_lea.vmem %s4, %s2956
      // Predicated region
      $region37: #{conv_init3_forward.1} parent=35 // pred_check
        %p2958 = pneg %p122
      $region38: #{conv_init3_forward.1} parent=35 // pred_check_branch
        %2960 = sbr.rel (%p2958) target = $region40
      $region39: #{conv_init3_forward.1} parent=35 // pred_region
        _
      $region40: #{conv_init3_forward.1} parent=35 // pred_fallthru
        _
    $region36: #{conv_init3_forward.1} parent=5 // pred_fallthru
      _
    %p2961 = scmp.le.s32.totalorder 2, %s10
    // Predicated region
    $region41: #{conv_init3_forward.1} parent=5 // pred_check
      %p2962 = pneg %p2961
    $region42: #{conv_init3_forward.1} parent=5 // pred_check_branch
      %2964 = sbr.rel (%p2962) target = $region44
    $region43: #{conv_init3_forward.1} parent=5 // pred_region
      %s2965 = ssub.s32 %s10, 2
      // Predicated region
      $region45: #{conv_init3_forward.1} parent=43 // pred_check
        %p2966 = pneg %p128
      $region46: #{conv_init3_forward.1} parent=43 // pred_check_branch
        %2968 = sbr.rel (%p2966) target = $region48
      $region47: #{conv_init3_forward.1} parent=43 // pred_region
        %p2969 = scmp.lt.s32.totalorder %s16, 1
        %s2970 = scalar_select %p2969, %s16, 1
        %s2971 = smul.addr %s2970, 24
        %s2972 = smul.addr %s2971, 8
        %s2973 = scalar_lea.vmem %s4, %s2972
      $region48: #{conv_init3_forward.1} parent=43 // pred_fallthru
        _
    $region44: #{conv_init3_forward.1} parent=5 // pred_fallthru
      _
  $region6: #{conv_init3_forward.1} parent=0 // loop_footer
    %s14 = sadd.s32 1, %s10
  $region7: #{conv_init3_forward.1} parent=0 // loop_footer_branch
    %9 = sbr.rel target = $region3
  $region8: #{conv_init3_forward.1} parent=0 // loop_exit
    _

</llo_original>
